<compile_context>
chip_gen: v7x
topology: tpu7x:2x2x1
jax: 0.10.0
libtpu: 0.0.40
codegen_flags: <defaults>
</compile_context>

<pallas_src>
import jax
import jax.numpy as jnp
from jax.experimental import pallas as pl
from jax.experimental.pallas import tpu as pltpu

jax.config.update("jax_default_matmul_precision", "highest")


# ----------------------------------------------------------------------------
# helpers
# ----------------------------------------------------------------------------
def _round_up(x: int, m: int) -> int:
    return (x + m - 1) // m * m


def _const_spec(arr):
    """BlockSpec for a small parameter that is fully resident (grid-invariant)."""
    zeros = (0,) * arr.ndim
    return pl.BlockSpec(arr.shape, lambda *_: zeros)


def _layernorm(x, w, b, eps=1e-5):
    """PyTorch-style LayerNorm over the last axis (biased variance)."""
    mu = jnp.mean(x, axis=-1, keepdims=True)
    var = jnp.mean(jnp.square(x - mu), axis=-1, keepdims=True)
    return (x - mu) * jax.lax.rsqrt(var + eps) * w + b


# ----------------------------------------------------------------------------
# kernel 1: fused feature MLP (ModelBase tail after the embedding gathers)
# ----------------------------------------------------------------------------
def _feature_kernel(emb_ref, cont_ref, w_comb_ref, b_comb_ref, w_cont_ref,
                    b_cont_ref, ln1_w_ref, ln1_b_ref, w_cat_x_ref, w_cat_c_ref,
                    b_cat_ref, ln2_w_ref, ln2_b_ref, o_ref):
    # comb_proj: Linear(4*intd -> hd) on the concatenated embeddings.
    x = (jnp.dot(emb_ref[...], w_comb_ref[...],
                 preferred_element_type=jnp.float32) + b_comb_ref[...])

    # cont_proj: Linear(2 -> intd) as two rank-1 updates (K=2 is too thin for
    # the MXU), then LayerNorm(intd).
    c = (cont_ref[:, 0:1] * w_cont_ref[0:1, :]
         + cont_ref[:, 1:2] * w_cont_ref[1:2, :] + b_cont_ref[...])
    c = _layernorm(c, ln1_w_ref[...], ln1_b_ref[...])

    # concat([X, cont_X]) -> ReLU -> Linear(intd+hd -> hd) -> LayerNorm(hd).
    # The concat is folded into a split matmul.
    y = (jnp.dot(jnp.maximum(x, 0.0), w_cat_x_ref[...],
                 preferred_element_type=jnp.float32)
         + jnp.dot(jnp.maximum(c, 0.0), w_cat_c_ref[...],
                   preferred_element_type=jnp.float32)
         + b_cat_ref[...])
    o_ref[...] = _layernorm(y, ln2_w_ref[...], ln2_b_ref[...])


def _feature_mlp(embed, cont, params):
    R, F = embed.shape
    hd = params["w_comb"].shape[1]
    TR = min(128, _round_up(R, 8))
    Rp = _round_up(R, TR)
    embed_p = jnp.pad(embed, ((0, Rp - R), (0, 0)))
    cont_p = jnp.pad(cont, ((0, Rp - R), (0, 0)))

    out = pl.pallas_call(
        _feature_kernel,
        out_shape=jax.ShapeDtypeStruct((Rp, hd), jnp.float32),
        grid=(Rp // TR,),
        in_specs=[
            pl.BlockSpec((TR, F), lambda r: (r, 0)),
            pl.BlockSpec((TR, 2), lambda r: (r, 0)),
            _const_spec(params["w_comb"]),
            _const_spec(params["b_comb"]),
            _const_spec(params["w_cont"]),
            _const_spec(params["b_cont"]),
            _const_spec(params["ln1_w"]),
            _const_spec(params["ln1_b"]),
            _const_spec(params["w_cat_x"]),
            _const_spec(params["w_cat_c"]),
            _const_spec(params["b_cat"]),
            _const_spec(params["ln2_w"]),
            _const_spec(params["ln2_b"]),
        ],
        out_specs=pl.BlockSpec((TR, hd), lambda r: (r, 0)),
        compiler_params=pltpu.CompilerParams(
            dimension_semantics=("parallel",)),
    )(embed_p, cont_p, params["w_comb"], params["b_comb"], params["w_cont"],
      params["b_cont"], params["ln1_w"], params["ln1_b"], params["w_cat_x"],
      params["w_cat_c"], params["b_cat"], params["ln2_w"], params["ln2_b"])
    return out[:R]


# ----------------------------------------------------------------------------
# kernel 2: one LSTM layer (grid over time, h/c carried in VMEM scratch)
# ----------------------------------------------------------------------------
def _lstm_layer_kernel(x_ref, w_ih_ref, w_hh_ref, b_ref, h_out_ref,
                       h_scr, c_scr):
    t = pl.program_id(0)

    @pl.when(t == 0)
    def _():
        h_scr[...] = jnp.zeros_like(h_scr)
        c_scr[...] = jnp.zeros_like(c_scr)

    H = h_scr.shape[-1]
    x_t = x_ref[0]                                         # (Bp, Hin)
    gates = (jnp.dot(x_t, w_ih_ref[...], preferred_element_type=jnp.float32)
             + jnp.dot(h_scr[...], w_hh_ref[...],
                       preferred_element_type=jnp.float32)
             + b_ref[...])                                 # (Bp, 4H)

    i_g = jax.nn.sigmoid(gates[:, 0 * H:1 * H])
    f_g = jax.nn.sigmoid(gates[:, 1 * H:2 * H])
    g_g = jnp.tanh(gates[:, 2 * H:3 * H])
    o_g = jax.nn.sigmoid(gates[:, 3 * H:4 * H])

    c_new = f_g * c_scr[...] + i_g * g_g
    h_new = o_g * jnp.tanh(c_new)
    c_scr[...] = c_new
    h_scr[...] = h_new
    h_out_ref[0] = h_new.astype(h_out_ref.dtype)


def _lstm_layer(x, w_ih, w_hh, b):
    """x: (S, Bp, Hin) time-major, batch already padded to a multiple of 8."""
    S, Bp, Hin = x.shape
    H = w_hh.shape[0]
    return pl.pallas_call(
        _lstm_layer_kernel,
        out_shape=jax.ShapeDtypeStruct((S, Bp, H), jnp.float32),
        grid=(S,),
        in_specs=[
            pl.BlockSpec((1, Bp, Hin), lambda t: (t, 0, 0)),
            _const_spec(w_ih),          # grid-invariant -> stays in VMEM
            _const_spec(w_hh),
            _const_spec(b),
        ],
        out_specs=pl.BlockSpec((1, Bp, H), lambda t: (t, 0, 0)),
        scratch_shapes=[pltpu.VMEM((Bp, H), jnp.float32),   # h carry
                        pltpu.VMEM((Bp, H), jnp.float32)],  # c carry
        compiler_params=pltpu.CompilerParams(
            dimension_semantics=("arbitrary",)),            # true recurrence
    )(x, w_ih, w_hh, b)


# ----------------------------------------------------------------------------
# kernel 3: fc head (Linear(hd, 1)) as a lane reduction
# ----------------------------------------------------------------------------
def _head_kernel(h_ref, w_ref, b_ref, o_ref):
    o_ref[...] = (jnp.sum(h_ref[...] * w_ref[...], axis=-1, keepdims=True)
                  + b_ref[...])


def _head(h, w_fc, b_fc):
    R, H = h.shape
    TR = min(128, _round_up(R, 8))
    Rp = _round_up(R, TR)
    h_p = jnp.pad(h, ((0, Rp - R), (0, 0)))
    out = pl.pallas_call(
        _head_kernel,
        out_shape=jax.ShapeDtypeStruct((Rp, 1), jnp.float32),
        grid=(Rp // TR,),
        in_specs=[pl.BlockSpec((TR, H), lambda r: (r, 0)),
                  _const_spec(w_fc),
                  _const_spec(b_fc)],
        out_specs=pl.BlockSpec((TR, 1), lambda r: (r, 0)),
        compiler_params=pltpu.CompilerParams(
            dimension_semantics=("parallel",)),
    )(h_p, w_fc, b_fc)
    return out[:R]


# ----------------------------------------------------------------------------
# full forward (matches LSTM.forward of the PyTorch module)
# ----------------------------------------------------------------------------
def lstm_forward(params, test, question, tag, elapsed, average_user_correct,
                 correct, mask, interaction):
    # `correct` and `mask` are accepted for interface parity with the PyTorch
    # module but are unused in its forward pass.
    del correct, mask
    B, S = interaction.shape
    hd = params["w_comb"].shape[1]
    intd = params["w_cont"].shape[1]

    # Embedding gathers + concat (data-dependent gather -> XLA glue).
    e_i = jnp.take(params["emb_interaction"], interaction.astype(jnp.int32), axis=0)
    e_t = jnp.take(params["emb_test"], test.astype(jnp.int32), axis=0)
    e_q = jnp.take(params["emb_question"], question.astype(jnp.int32), axis=0)
    e_g = jnp.take(params["emb_tag"], tag.astype(jnp.int32), axis=0)
    embed = jnp.concatenate([e_i, e_t, e_q, e_g], axis=-1).reshape(B * S, 4 * intd)
    cont = jnp.stack([elapsed.astype(jnp.float32),
                      average_user_correct.astype(jnp.float32)],
                     axis=-1).reshape(B * S, 2)

    # Fused feature MLP (Pallas).
    X = _feature_mlp(embed, cont, params).reshape(B, S, hd)

    # 2-layer LSTM (Pallas), time-major with batch padded to a sublane multiple.
    Bp = _round_up(B, 8)
    h = jnp.transpose(X, (1, 0, 2))
    if Bp != B:
        h = jnp.pad(h, ((0, 0), (0, Bp - B), (0, 0)))
    for layer in range(2):
        h = _lstm_layer(h, params[f"w_ih_{layer}"], params[f"w_hh_{layer}"],
                        params[f"b_{layer}"])
    h = jnp.transpose(h[:, :B, :], (1, 0, 2)).reshape(B * S, hd)

    # fc head (Pallas).
    logits = _head(h, params["w_fc"], params["b_fc"])
    return logits.reshape(B, S)


# ----------------------------------------------------------------------------
# parameters + pure-JAX reference (PyTorch semantics) for validation
# ----------------------------------------------------------------------------
def init_params(key, hidden_dim=64, n_tests=1538, n_questions=9455, n_tags=913):
    hd = hidden_dim
    intd = hidden_dim // 3
    ks = jax.random.split(key, 24)
    nrm = lambda k, shape, s: s * jax.random.normal(k, shape, jnp.float32)
    p = {
        "emb_interaction": nrm(ks[0], (3, intd), 0.1),
        "emb_test": nrm(ks[1], (n_tests + 1, intd), 0.1),
        "emb_question": nrm(ks[2], (n_questions + 1, intd), 0.1),
        "emb_tag": nrm(ks[3], (n_tags + 1, intd), 0.1),
        "w_comb": nrm(ks[4], (4 * intd, hd), 0.15),
        "b_comb": nrm(ks[5], (1, hd), 0.05),
        "w_cont": nrm(ks[6], (2, intd), 0.3),
        "b_cont": nrm(ks[7], (1, intd), 0.05),
        "ln1_w": 1.0 + nrm(ks[8], (1, intd), 0.05),
        "ln1_b": nrm(ks[9], (1, intd), 0.05),
        "w_cat_x": nrm(ks[10], (hd, hd), 0.15),     # rows for X (first hd cols of concat)
        "w_cat_c": nrm(ks[11], (intd, hd), 0.15),   # rows for cont_X (last intd cols)
        "b_cat": nrm(ks[12], (1, hd), 0.05),
        "ln2_w": 1.0 + nrm(ks[13], (1, hd), 0.05),
        "ln2_b": nrm(ks[14], (1, hd), 0.05),
        "w_fc": nrm(ks[21], (1, hd), 0.15),
        "b_fc": nrm(ks[22], (1, 1), 0.05),
    }
    for layer in range(2):
        p[f"w_ih_{layer}"] = nrm(ks[15 + 3 * layer], (hd, 4 * hd), 0.12)
        p[f"w_hh_{layer}"] = nrm(ks[16 + 3 * layer], (hd, 4 * hd), 0.12)
        p[f"b_{layer}"] = nrm(ks[17 + 3 * layer], (1, 4 * hd), 0.05)  # b_ih + b_hh
    return p


def _ref_lstm_layer(x, w_ih, w_hh, b):
    B = x.shape[0]
    H = w_hh.shape[0]

    def step(carry, x_t):
        h, c = carry
        gates = x_t @ w_ih + h @ w_hh + b
        i_g = jax.nn.sigmoid(gates[:, 0 * H:1 * H])
        f_g = jax.nn.sigmoid(gates[:, 1 * H:2 * H])
        g_g = jnp.tanh(gates[:, 2 * H:3 * H])
        o_g = jax.nn.sigmoid(gates[:, 3 * H:4 * H])
        c = f_g * c + i_g * g_g
        h = o_g * jnp.tanh(c)
        return (h, c), h

    init = (jnp.zeros((B, H), jnp.float32), jnp.zeros((B, H), jnp.float32))
    _, hs = jax.lax.scan(step, init, jnp.swapaxes(x, 0, 1))
    return jnp.swapaxes(hs, 0, 1)


def ref_forward(params, test, question, tag, elapsed, average_user_correct,
                correct, mask, interaction):
    del correct, mask
    e_i = params["emb_interaction"][interaction.astype(jnp.int32)]
    e_t = params["emb_test"][test.astype(jnp.int32)]
    e_q = params["emb_question"][question.astype(jnp.int32)]
    e_g = params["emb_tag"][tag.astype(jnp.int32)]
    embed = jnp.concatenate([e_i, e_t, e_q, e_g], axis=-1)
    X = embed @ params["w_comb"] + params["b_comb"]
    cont = jnp.stack([elapsed.astype(jnp.float32),
                      average_user_correct.astype(jnp.float32)], axis=-1)
    C = cont @ params["w_cont"] + params["b_cont"]
    C = _layernorm(C, params["ln1_w"], params["ln1_b"])
    Xcat = jax.nn.relu(jnp.concatenate([X, C], axis=-1))
    W_cat = jnp.concatenate([params["w_cat_x"], params["w_cat_c"]], axis=0)
    Y = _layernorm(Xcat @ W_cat + params["b_cat"], params["ln2_w"], params["ln2_b"])
    h = Y
    for layer in range(2):
        h = _ref_lstm_layer(h, params[f"w_ih_{layer}"], params[f"w_hh_{layer}"],
                            params[f"b_{layer}"])
    return jnp.einsum("bsh,h->bs", h, params["w_fc"][0]) + params["b_fc"][0, 0]


# ----------------------------------------------------------------------------
# demo / self-check
# ----------------------------------------------------------------------------
if __name__ == "__main__":
    B, S, hidden_dim = 2, 8, 64
    n_tests, n_questions, n_tags = 1538, 9455, 913

    key = jax.random.PRNGKey(0)
    k_param, k_in = jax.random.split(key)
    params = init_params(k_param, hidden_dim, n_tests, n_questions, n_tags)

    kt, kq, kg, ke, ka, kc, ki = jax.random.split(k_in, 7)
    test = jax.random.randint(kt, (B, S), 0, n_tests + 1)
    question = jax.random.randint(kq, (B, S), 0, n_questions + 1)
    tag = jax.random.randint(kg, (B, S), 0, n_tags + 1)
    elapsed = jax.random.uniform(ke, (B, S), jnp.float32, 0.0, 30.0)
    average_user_correct = jax.random.uniform(ka, (B, S), jnp.float32, 0.0, 1.0)
    correct = jax.random.randint(kc, (B, S), 0, 2)
    mask = jnp.ones((B, S), jnp.int32)
    interaction = jax.random.randint(ki, (B, S), 0, 3)

    out = lstm_forward(params, test, question, tag, elapsed,
                       average_user_correct, correct, mask, interaction)
    out = jax.block_until_ready(out)
    assert out.shape == (B, S), out.shape

    ref = ref_forward(params, test, question, tag, elapsed,
                      average_user_correct, correct, mask, interaction)
    err = float(jnp.max(jnp.abs(out - ref)))
    assert err < 1e-2, f"mismatch vs pure-JAX reference: max abs err = {err}"

    print("KERNEL_OK")
</pallas_src>

<mosaic_0001>
module attributes {stable_mosaic.version = 11 : i64} {
  func.func @_feature_kernel(%arg0: i32, %arg1: memref<16x84xf32, #tpu.memory_space<vmem>>, %arg2: memref<16x2xf32, #tpu.memory_space<vmem>>, %arg3: memref<84x64xf32, #tpu.memory_space<vmem>>, %arg4: memref<1x64xf32, #tpu.memory_space<vmem>>, %arg5: memref<2x21xf32, #tpu.memory_space<vmem>>, %arg6: memref<1x21xf32, #tpu.memory_space<vmem>>, %arg7: memref<1x21xf32, #tpu.memory_space<vmem>>, %arg8: memref<1x21xf32, #tpu.memory_space<vmem>>, %arg9: memref<64x64xf32, #tpu.memory_space<vmem>>, %arg10: memref<21x64xf32, #tpu.memory_space<vmem>>, %arg11: memref<1x64xf32, #tpu.memory_space<vmem>>, %arg12: memref<1x64xf32, #tpu.memory_space<vmem>>, %arg13: memref<1x64xf32, #tpu.memory_space<vmem>>, %arg14: memref<16x64xf32, #tpu.memory_space<vmem>>) attributes {dimension_semantics = [#tpu.dimension_semantics<parallel>], iteration_bounds = array<i64: 1>, scalar_prefetch = 0 : i64, scratch_operands = 0 : i64, tpu.core_type = #tpu.core_type<tc>, window_params = [{transform_indices = @transform_0, window_bounds = array<i64: 16, 84>}, {transform_indices = @transform_1, window_bounds = array<i64: 16, 2>}, {pipeline_mode = #tpu.pipeline_mode<synchronous>, transform_indices = @transform_2, window_bounds = array<i64: 84, 64>}, {pipeline_mode = #tpu.pipeline_mode<synchronous>, transform_indices = @transform_3, window_bounds = array<i64: 1, 64>}, {pipeline_mode = #tpu.pipeline_mode<synchronous>, transform_indices = @transform_4, window_bounds = array<i64: 2, 21>}, {pipeline_mode = #tpu.pipeline_mode<synchronous>, transform_indices = @transform_5, window_bounds = array<i64: 1, 21>}, {pipeline_mode = #tpu.pipeline_mode<synchronous>, transform_indices = @transform_6, window_bounds = array<i64: 1, 21>}, {pipeline_mode = #tpu.pipeline_mode<synchronous>, transform_indices = @transform_7, window_bounds = array<i64: 1, 21>}, {pipeline_mode = #tpu.pipeline_mode<synchronous>, transform_indices = @transform_8, window_bounds = array<i64: 64, 64>}, {pipeline_mode = #tpu.pipeline_mode<synchronous>, transform_indices = @transform_9, window_bounds = array<i64: 21, 64>}, {pipeline_mode = #tpu.pipeline_mode<synchronous>, transform_indices = @transform_10, window_bounds = array<i64: 1, 64>}, {pipeline_mode = #tpu.pipeline_mode<synchronous>, transform_indices = @transform_11, window_bounds = array<i64: 1, 64>}, {pipeline_mode = #tpu.pipeline_mode<synchronous>, transform_indices = @transform_12, window_bounds = array<i64: 1, 64>}, {transform_indices = @transform_13, window_bounds = array<i64: 16, 64>}]} {
    %c0 = arith.constant 0 : index
    %c0_0 = arith.constant 0 : index
    %0 = vector.load %arg1[%c0, %c0_0] : memref<16x84xf32, #tpu.memory_space<vmem>>, vector<16x84xf32>
    %c0_1 = arith.constant 0 : index
    %c0_2 = arith.constant 0 : index
    %1 = vector.load %arg3[%c0_1, %c0_2] : memref<84x64xf32, #tpu.memory_space<vmem>>, vector<84x64xf32>
    %cst = arith.constant dense<0.000000e+00> : vector<16x64xf32>
    %2 = tpu.matmul %0, %1, %cst {dimension_numbers = #tpu.dot_dimension_numbers<[1], [0], [0], [1], [0, 0, 1, 1], [], []>, precision = #tpu.contract_precision<fp32>} : vector<16x84xf32>, vector<84x64xf32>, vector<16x64xf32> -> vector<16x64xf32>
    %c0_3 = arith.constant 0 : index
    %c0_4 = arith.constant 0 : index
    %3 = vector.load %arg4[%c0_3, %c0_4] : memref<1x64xf32, #tpu.memory_space<vmem>>, vector<1x64xf32>
    %4 = vector.broadcast %3 : vector<1x64xf32> to vector<16x64xf32>
    %5 = arith.addf %2, %4 : vector<16x64xf32>
    %c0_5 = arith.constant 0 : index
    %c0_6 = arith.constant 0 : index
    %6 = vector.load %arg2[%c0_5, %c0_6] : memref<16x2xf32, #tpu.memory_space<vmem>>, vector<16x1xf32>
    %c0_7 = arith.constant 0 : index
    %c0_8 = arith.constant 0 : index
    %7 = vector.load %arg5[%c0_7, %c0_8] : memref<2x21xf32, #tpu.memory_space<vmem>>, vector<1x21xf32>
    %8 = vector.broadcast %6 : vector<16x1xf32> to vector<16x21xf32>
    %9 = vector.broadcast %7 : vector<1x21xf32> to vector<16x21xf32>
    %10 = arith.mulf %8, %9 : vector<16x21xf32>
    %c0_9 = arith.constant 0 : index
    %c1 = arith.constant 1 : index
    %11 = vector.load %arg2[%c0_9, %c1] : memref<16x2xf32, #tpu.memory_space<vmem>>, vector<16x1xf32>
    %c1_10 = arith.constant 1 : index
    %c0_11 = arith.constant 0 : index
    %12 = vector.load %arg5[%c1_10, %c0_11] : memref<2x21xf32, #tpu.memory_space<vmem>>, vector<1x21xf32>
    %13 = vector.broadcast %11 : vector<16x1xf32> to vector<16x21xf32>
    %14 = vector.broadcast %12 : vector<1x21xf32> to vector<16x21xf32>
    %15 = arith.mulf %13, %14 : vector<16x21xf32>
    %16 = arith.addf %10, %15 : vector<16x21xf32>
    %c0_12 = arith.constant 0 : index
    %c0_13 = arith.constant 0 : index
    %17 = vector.load %arg6[%c0_12, %c0_13] : memref<1x21xf32, #tpu.memory_space<vmem>>, vector<1x21xf32>
    %18 = vector.broadcast %17 : vector<1x21xf32> to vector<16x21xf32>
    %19 = arith.addf %16, %18 : vector<16x21xf32>
    %c0_14 = arith.constant 0 : index
    %c0_15 = arith.constant 0 : index
    %20 = vector.load %arg7[%c0_14, %c0_15] : memref<1x21xf32, #tpu.memory_space<vmem>>, vector<1x21xf32>
    %c0_16 = arith.constant 0 : index
    %c0_17 = arith.constant 0 : index
    %21 = vector.load %arg8[%c0_16, %c0_17] : memref<1x21xf32, #tpu.memory_space<vmem>>, vector<1x21xf32>
    %cst_18 = arith.constant dense<0.000000e+00> : vector<16xf32>
    %22 = vector.multi_reduction <add>, %19, %cst_18 [1] : vector<16x21xf32> to vector<16xf32>
    %23 = vector.shape_cast %22 : vector<16xf32> to vector<16x1xf32>
    %cst_19 = arith.constant 2.100000e+01 : f32
    %24 = vector.broadcast %cst_19 : f32 to vector<16x1xf32>
    %25 = arith.divf %23, %24 : vector<16x1xf32>
    %26 = vector.broadcast %25 : vector<16x1xf32> to vector<16x21xf32>
    %27 = arith.subf %19, %26 : vector<16x21xf32>
    %28 = arith.mulf %27, %27 : vector<16x21xf32>
    %cst_20 = arith.constant dense<0.000000e+00> : vector<16xf32>
    %29 = vector.multi_reduction <add>, %28, %cst_20 [1] : vector<16x21xf32> to vector<16xf32>
    %30 = vector.shape_cast %29 : vector<16xf32> to vector<16x1xf32>
    %cst_21 = arith.constant 2.100000e+01 : f32
    %31 = vector.broadcast %cst_21 : f32 to vector<16x1xf32>
    %32 = arith.divf %30, %31 : vector<16x1xf32>
    %33 = vector.broadcast %25 : vector<16x1xf32> to vector<16x21xf32>
    %34 = arith.subf %19, %33 : vector<16x21xf32>
    %cst_22 = arith.constant 9.99999974E-6 : f32
    %35 = vector.broadcast %cst_22 : f32 to vector<16x1xf32>
    %36 = arith.addf %32, %35 : vector<16x1xf32>
    %37 = math.rsqrt %36 : vector<16x1xf32>
    %38 = vector.broadcast %37 : vector<16x1xf32> to vector<16x21xf32>
    %39 = arith.mulf %34, %38 : vector<16x21xf32>
    %40 = vector.broadcast %20 : vector<1x21xf32> to vector<16x21xf32>
    %41 = arith.mulf %39, %40 : vector<16x21xf32>
    %42 = vector.broadcast %21 : vector<1x21xf32> to vector<16x21xf32>
    %43 = arith.addf %41, %42 : vector<16x21xf32>
    %cst_23 = arith.constant 0.000000e+00 : f32
    %44 = vector.broadcast %cst_23 : f32 to vector<16x64xf32>
    %45 = arith.maximumf %5, %44 : vector<16x64xf32>
    %c0_24 = arith.constant 0 : index
    %c0_25 = arith.constant 0 : index
    %46 = vector.load %arg9[%c0_24, %c0_25] : memref<64x64xf32, #tpu.memory_space<vmem>>, vector<64x64xf32>
    %cst_26 = arith.constant dense<0.000000e+00> : vector<16x64xf32>
    %47 = tpu.matmul %45, %46, %cst_26 {dimension_numbers = #tpu.dot_dimension_numbers<[1], [0], [0], [1], [0, 0, 1, 1], [], []>, precision = #tpu.contract_precision<fp32>} : vector<16x64xf32>, vector<64x64xf32>, vector<16x64xf32> -> vector<16x64xf32>
    %cst_27 = arith.constant 0.000000e+00 : f32
    %48 = vector.broadcast %cst_27 : f32 to vector<16x21xf32>
    %49 = arith.maximumf %43, %48 : vector<16x21xf32>
    %c0_28 = arith.constant 0 : index
    %c0_29 = arith.constant 0 : index
    %50 = vector.load %arg10[%c0_28, %c0_29] : memref<21x64xf32, #tpu.memory_space<vmem>>, vector<21x64xf32>
    %cst_30 = arith.constant dense<0.000000e+00> : vector<16x64xf32>
    %51 = tpu.matmul %49, %50, %cst_30 {dimension_numbers = #tpu.dot_dimension_numbers<[1], [0], [0], [1], [0, 0, 1, 1], [], []>, precision = #tpu.contract_precision<fp32>} : vector<16x21xf32>, vector<21x64xf32>, vector<16x64xf32> -> vector<16x64xf32>
    %52 = arith.addf %47, %51 : vector<16x64xf32>
    %c0_31 = arith.constant 0 : index
    %c0_32 = arith.constant 0 : index
    %53 = vector.load %arg11[%c0_31, %c0_32] : memref<1x64xf32, #tpu.memory_space<vmem>>, vector<1x64xf32>
    %54 = vector.broadcast %53 : vector<1x64xf32> to vector<16x64xf32>
    %55 = arith.addf %52, %54 : vector<16x64xf32>
    %c0_33 = arith.constant 0 : index
    %c0_34 = arith.constant 0 : index
    %56 = vector.load %arg12[%c0_33, %c0_34] : memref<1x64xf32, #tpu.memory_space<vmem>>, vector<1x64xf32>
    %c0_35 = arith.constant 0 : index
    %c0_36 = arith.constant 0 : index
    %57 = vector.load %arg13[%c0_35, %c0_36] : memref<1x64xf32, #tpu.memory_space<vmem>>, vector<1x64xf32>
    %cst_37 = arith.constant dense<0.000000e+00> : vector<16xf32>
    %58 = vector.multi_reduction <add>, %55, %cst_37 [1] : vector<16x64xf32> to vector<16xf32>
    %59 = vector.shape_cast %58 : vector<16xf32> to vector<16x1xf32>
    %cst_38 = arith.constant 6.400000e+01 : f32
    %60 = vector.broadcast %cst_38 : f32 to vector<16x1xf32>
    %61 = arith.divf %59, %60 : vector<16x1xf32>
    %62 = vector.broadcast %61 : vector<16x1xf32> to vector<16x64xf32>
    %63 = arith.subf %55, %62 : vector<16x64xf32>
    %64 = arith.mulf %63, %63 : vector<16x64xf32>
    %cst_39 = arith.constant dense<0.000000e+00> : vector<16xf32>
    %65 = vector.multi_reduction <add>, %64, %cst_39 [1] : vector<16x64xf32> to vector<16xf32>
    %66 = vector.shape_cast %65 : vector<16xf32> to vector<16x1xf32>
    %cst_40 = arith.constant 6.400000e+01 : f32
    %67 = vector.broadcast %cst_40 : f32 to vector<16x1xf32>
    %68 = arith.divf %66, %67 : vector<16x1xf32>
    %69 = vector.broadcast %61 : vector<16x1xf32> to vector<16x64xf32>
    %70 = arith.subf %55, %69 : vector<16x64xf32>
    %cst_41 = arith.constant 9.99999974E-6 : f32
    %71 = vector.broadcast %cst_41 : f32 to vector<16x1xf32>
    %72 = arith.addf %68, %71 : vector<16x1xf32>
    %73 = math.rsqrt %72 : vector<16x1xf32>
    %74 = vector.broadcast %73 : vector<16x1xf32> to vector<16x64xf32>
    %75 = arith.mulf %70, %74 : vector<16x64xf32>
    %76 = vector.broadcast %56 : vector<1x64xf32> to vector<16x64xf32>
    %77 = arith.mulf %75, %76 : vector<16x64xf32>
    %78 = vector.broadcast %57 : vector<1x64xf32> to vector<16x64xf32>
    %79 = arith.addf %77, %78 : vector<16x64xf32>
    %c0_42 = arith.constant 0 : index
    %c0_43 = arith.constant 0 : index
    %80 = vector.load %arg14[%c0_42, %c0_43] : memref<16x64xf32, #tpu.memory_space<vmem>>, vector<16x64xf32>
    tpu.vector_store %arg14[%c0_42, %c0_43], %79 {strides = array<i32>} : memref<16x64xf32, #tpu.memory_space<vmem>>, vector<16x64xf32>,
    return
  }
  func.func @transform_0(%arg0: i32) -> (i32, i32) {
    %c0_i32 = arith.constant 0 : i32
    %c0_i32_0 = arith.constant 0 : i32
    return %arg0, %c0_i32 : i32, i32
  }
  func.func @transform_1(%arg0: i32) -> (i32, i32) {
    %c0_i32 = arith.constant 0 : i32
    %c0_i32_0 = arith.constant 0 : i32
    return %arg0, %c0_i32 : i32, i32
  }
  func.func @transform_2(%arg0: i32) -> (i32, i32) {
    %c0_i32 = arith.constant 0 : i32
    %c0_i32_0 = arith.constant 0 : i32
    %c0_i32_1 = arith.constant 0 : i32
    return %c0_i32, %c0_i32_0 : i32, i32
  }
  func.func @transform_3(%arg0: i32) -> (i32, i32) {
    %c0_i32 = arith.constant 0 : i32
    %c0_i32_0 = arith.constant 0 : i32
    %c0_i32_1 = arith.constant 0 : i32
    return %c0_i32, %c0_i32_0 : i32, i32
  }
  func.func @transform_4(%arg0: i32) -> (i32, i32) {
    %c0_i32 = arith.constant 0 : i32
    %c0_i32_0 = arith.constant 0 : i32
    %c0_i32_1 = arith.constant 0 : i32
    return %c0_i32, %c0_i32_0 : i32, i32
  }
  func.func @transform_5(%arg0: i32) -> (i32, i32) {
    %c0_i32 = arith.constant 0 : i32
    %c0_i32_0 = arith.constant 0 : i32
    %c0_i32_1 = arith.constant 0 : i32
    return %c0_i32, %c0_i32_0 : i32, i32
  }
  func.func @transform_6(%arg0: i32) -> (i32, i32) {
    %c0_i32 = arith.constant 0 : i32
    %c0_i32_0 = arith.constant 0 : i32
    %c0_i32_1 = arith.constant 0 : i32
    return %c0_i32, %c0_i32_0 : i32, i32
  }
  func.func @transform_7(%arg0: i32) -> (i32, i32) {
    %c0_i32 = arith.constant 0 : i32
    %c0_i32_0 = arith.constant 0 : i32
    %c0_i32_1 = arith.constant 0 : i32
    return %c0_i32, %c0_i32_0 : i32, i32
  }
  func.func @transform_8(%arg0: i32) -> (i32, i32) {
    %c0_i32 = arith.constant 0 : i32
    %c0_i32_0 = arith.constant 0 : i32
    %c0_i32_1 = arith.constant 0 : i32
    return %c0_i32, %c0_i32_0 : i32, i32
  }
  func.func @transform_9(%arg0: i32) -> (i32, i32) {
    %c0_i32 = arith.constant 0 : i32
    %c0_i32_0 = arith.constant 0 : i32
    %c0_i32_1 = arith.constant 0 : i32
    return %c0_i32, %c0_i32_0 : i32, i32
  }
  func.func @transform_10(%arg0: i32) -> (i32, i32) {
    %c0_i32 = arith.constant 0 : i32
    %c0_i32_0 = arith.constant 0 : i32
    %c0_i32_1 = arith.constant 0 : i32
    return %c0_i32, %c0_i32_0 : i32, i32
  }
  func.func @transform_11(%arg0: i32) -> (i32, i32) {
    %c0_i32 = arith.constant 0 : i32
    %c0_i32_0 = arith.constant 0 : i32
    %c0_i32_1 = arith.constant 0 : i32
    return %c0_i32, %c0_i32_0 : i32, i32
  }
  func.func @transform_12(%arg0: i32) -> (i32, i32) {
    %c0_i32 = arith.constant 0 : i32
    %c0_i32_0 = arith.constant 0 : i32
    %c0_i32_1 = arith.constant 0 : i32
    return %c0_i32, %c0_i32_0 : i32, i32
  }
  func.func @transform_13(%arg0: i32) -> (i32, i32) {
    %c0_i32 = arith.constant 0 : i32
    %c0_i32_0 = arith.constant 0 : i32
    return %arg0, %c0_i32 : i32, i32
  }
}

</mosaic_0001>

<llo_original>
// kernel: tpu_custom_call.1
$region0: #{tpu_custom_call.1}
  #allocation0 [shape = 'u32[]', space=smem, size = 0x4, offset = 0x4, fixed_abs, tag = 'smem constant byte address 0x4 - core index']
  #allocation1 [shape = 'u32[144,128]{1,0:T(1,128)}', space=vmem, size = 0x12000, scoped, tag = 'internal scratch']
  %s0 = inlined_call_operand.vmem [shape: f32[16,84], index: 0, kind: input, shape index: {}]
  %s1 = inlined_call_operand.vmem [shape: f32[16,2], index: 1, kind: input, shape index: {}]
  %s2 = inlined_call_operand.vmem [shape: f32[84,64], index: 2, kind: input, shape index: {}]
  %s3 = inlined_call_operand.vmem [shape: f32[1,64], index: 3, kind: input, shape index: {}]
  %s4 = inlined_call_operand.vmem [shape: f32[2,21], index: 4, kind: input, shape index: {}]
  %s5 = inlined_call_operand.vmem [shape: f32[1,21], index: 5, kind: input, shape index: {}]
  %s6 = inlined_call_operand.vmem [shape: f32[1,21], index: 6, kind: input, shape index: {}]
  %s7 = inlined_call_operand.vmem [shape: f32[1,21], index: 7, kind: input, shape index: {}]
  %s8 = inlined_call_operand.vmem [shape: f32[64,64], index: 8, kind: input, shape index: {}]
  %s9 = inlined_call_operand.vmem [shape: f32[21,64], index: 9, kind: input, shape index: {}]
  %s10 = inlined_call_operand.vmem [shape: f32[1,64], index: 10, kind: input, shape index: {}]
  %s11 = inlined_call_operand.vmem [shape: f32[1,64], index: 11, kind: input, shape index: {}]
  %s12 = inlined_call_operand.vmem [shape: f32[1,64], index: 12, kind: input, shape index: {}]
  %s13 = inlined_call_operand.hbm [shape: f32[16,64], index: 13, kind: output, shape index: {}]
  %s14 = sld [smem:[#allocation0]]
  $region62: #{tpu_custom_call.1} parent=0
    _
  %s16 = ssub.s32 1, %s14
  %s17 = scalar_select 0, %s16, %s14
  $region1: #{tpu_custom_call.1} parent=0
    #allocation2 [shape = 'u8[8192]{0}', space=vmem, size = 0x2000, scoped, tag = 'output window, operand 0, single buffered']
    #allocation3 [shape = 's32[1]{0}', space=sflag, size = 0x4, scoped, tag = 'scoped memory for tpu_custom_call.1']
    %18 = vsyncpa [#allocation3], 0
    // Predicated region
    $region2: #{tpu_custom_call.1} parent=1 // pred_check
      _
    $region3: #{tpu_custom_call.1} parent=1 // pred_check_branch
      %20 = sbr.rel (0) target = $region5
    $region4: #{tpu_custom_call.1} parent=1 // pred_region
      _
    $region5: #{tpu_custom_call.1} parent=1 // pred_fallthru
      _
    // Predicated region
    $region6: #{tpu_custom_call.1} parent=1 // pred_check
      _
    $region7: #{tpu_custom_call.1} parent=1 // pred_check_branch
      %22 = sbr.rel (0) target = $region9
    $region8: #{tpu_custom_call.1} parent=1 // pred_region
      _
    $region9: #{tpu_custom_call.1} parent=1 // pred_fallthru
      _
    // Predicated region
    $region10: #{tpu_custom_call.1} parent=1 // pred_check
      _
    $region11: #{tpu_custom_call.1} parent=1 // pred_check_branch
      %24 = sbr.rel (0) target = $region13
    $region12: #{tpu_custom_call.1} parent=1 // pred_region
      _
    $region13: #{tpu_custom_call.1} parent=1 // pred_fallthru
      _
    // Predicated region
    $region14: #{tpu_custom_call.1} parent=1 // pred_check
      _
    $region15: #{tpu_custom_call.1} parent=1 // pred_check_branch
      %26 = sbr.rel (0) target = $region17
    $region16: #{tpu_custom_call.1} parent=1 // pred_region
      _
    $region17: #{tpu_custom_call.1} parent=1 // pred_fallthru
      _
    // Predicated region
    $region18: #{tpu_custom_call.1} parent=1 // pred_check
      _
    $region19: #{tpu_custom_call.1} parent=1 // pred_check_branch
      %28 = sbr.rel (0) target = $region21
    $region20: #{tpu_custom_call.1} parent=1 // pred_region
      _
    $region21: #{tpu_custom_call.1} parent=1 // pred_fallthru
      _
    // Predicated region
    $region22: #{tpu_custom_call.1} parent=1 // pred_check
      _
    $region23: #{tpu_custom_call.1} parent=1 // pred_check_branch
      %30 = sbr.rel (0) target = $region25
    $region24: #{tpu_custom_call.1} parent=1 // pred_region
      _
    $region25: #{tpu_custom_call.1} parent=1 // pred_fallthru
      _
    // Predicated region
    $region26: #{tpu_custom_call.1} parent=1 // pred_check
      _
    $region27: #{tpu_custom_call.1} parent=1 // pred_check_branch
      %32 = sbr.rel (0) target = $region29
    $region28: #{tpu_custom_call.1} parent=1 // pred_region
      _
    $region29: #{tpu_custom_call.1} parent=1 // pred_fallthru
      _
    // Predicated region
    $region30: #{tpu_custom_call.1} parent=1 // pred_check
      _
    $region31: #{tpu_custom_call.1} parent=1 // pred_check_branch
      %34 = sbr.rel (0) target = $region33
    $region32: #{tpu_custom_call.1} parent=1 // pred_region
      _
    $region33: #{tpu_custom_call.1} parent=1 // pred_fallthru
      _
    // Predicated region
    $region34: #{tpu_custom_call.1} parent=1 // pred_check
      _
    $region35: #{tpu_custom_call.1} parent=1 // pred_check_branch
      %36 = sbr.rel (0) target = $region37
    $region36: #{tpu_custom_call.1} parent=1 // pred_region
      _
    $region37: #{tpu_custom_call.1} parent=1 // pred_fallthru
      _
    // Predicated region
    $region38: #{tpu_custom_call.1} parent=1 // pred_check
      _
    $region39: #{tpu_custom_call.1} parent=1 // pred_check_branch
      %38 = sbr.rel (0) target = $region41
    $region40: #{tpu_custom_call.1} parent=1 // pred_region
      _
    $region41: #{tpu_custom_call.1} parent=1 // pred_fallthru
      _
    // Predicated region
    $region42: #{tpu_custom_call.1} parent=1 // pred_check
      _
    $region43: #{tpu_custom_call.1} parent=1 // pred_check_branch
      %40 = sbr.rel (0) target = $region45
    $region44: #{tpu_custom_call.1} parent=1 // pred_region
      _
    $region45: #{tpu_custom_call.1} parent=1 // pred_fallthru
      _
    // Predicated region
    $region46: #{tpu_custom_call.1} parent=1 // pred_check
      _
    $region47: #{tpu_custom_call.1} parent=1 // pred_check_branch
      %42 = sbr.rel (0) target = $region49
    $region48: #{tpu_custom_call.1} parent=1 // pred_region
      _
    $region49: #{tpu_custom_call.1} parent=1 // pred_fallthru
      _
    // Predicated region
    $region50: #{tpu_custom_call.1} parent=1 // pred_check
      _
    $region51: #{tpu_custom_call.1} parent=1 // pred_check_branch
      %44 = sbr.rel (0) target = $region53
    $region52: #{tpu_custom_call.1} parent=1 // pred_region
      _
    $region53: #{tpu_custom_call.1} parent=1 // pred_fallthru
      _
    %v45 = vld [vmem:[%s0] sm:$0xff]
    %v46 = vld [vmem:[%s0 + $0x8] sm:$0xff]
    %v47 = vld [vmem:[%s2] sm:$0xff]
    %v48 = vld [vmem:[%s2 + $0x8] sm:$0xff]
    %v49 = vld [vmem:[%s2 + $0x10] sm:$0xff]
    %v50 = vld [vmem:[%s2 + $0x18] sm:$0xff]
    %v51 = vld [vmem:[%s2 + $0x20] sm:$0xff]
    %v52 = vld [vmem:[%s2 + $0x28] sm:$0xff]
    %v53 = vld [vmem:[%s2 + $0x30] sm:$0xff]
    %v54 = vld [vmem:[%s2 + $0x38] sm:$0xff]
    %v55 = vld [vmem:[%s2 + $0x40] sm:$0xff]
    %v56 = vld [vmem:[%s2 + $0x48] sm:$0xff]
    %v57 = vld [vmem:[%s2 + $0x50] sm:$0xf]
    %v58 = vld [vmem:[%s3] sm:$0x1]
    %v60 = vlaneseq
    %v61 = vshrl.u32 %v60, 7
    %v62 = vsub.s32 0, %v61
    %v63 = vrot.slane %v58, %v62
    %vm65 = vcmask 687104
    %v67 = vsel %vm65, %v45, 0
    %v70 = vsel %vm65, %v46, 0
    %vm72 = vcmask 1043456
    %v74 = vsel %vm72, %v57, 0
    %76 = vmatprep.subr.mxu0 0.0
    %v77 = vand.u32 %v47, 4294901760
    %78 = vmatpush1.msra.mxu0 %v77
    %79 = vmatprep.subr.mxu0 0.0
    %v80 = vand.u32 %v48, 4294901760
    %81 = vmatpush1.msra.mxu0 %v80
    %82 = vmatprep.subr.mxu0 0.0
    %v83 = vand.u32 %v49, 4294901760
    %84 = vmatpush1.msra.mxu0 %v83
    %85 = vmatprep.subr.mxu0 0.0
    %v86 = vand.u32 %v50, 4294901760
    %87 = vmatpush1.msra.mxu0 %v86
    %88 = vmatprep.subr.mxu0 0.0
    %v89 = vand.u32 %v51, 4294901760
    %90 = vmatpush1.msra.mxu0 %v89
    %91 = vmatprep.subr.mxu0 0.0
    %v92 = vand.u32 %v52, 4294901760
    %93 = vmatpush1.msra.mxu0 %v92
    %94 = vmatprep.subr.mxu0 0.0
    %v95 = vand.u32 %v53, 4294901760
    %96 = vmatpush1.msra.mxu0 %v95
    %97 = vmatprep.subr.mxu0 0.0
    %v98 = vand.u32 %v54, 4294901760
    %99 = vmatpush1.msra.mxu0 %v98
    %100 = vmatprep.subr.mxu0 0.0
    %v101 = vand.u32 %v55, 4294901760
    %102 = vmatpush1.msra.mxu0 %v101
    %103 = vmatprep.subr.mxu0 0.0
    %v104 = vand.u32 %v56, 4294901760
    %105 = vmatpush1.msra.mxu0 %v104
    %106 = vmatprep.subr.mxu0 0.0
    %v107 = vand.u32 %v74, 4294901760
    %108 = vmatpush1.msra.mxu0 %v107
    %109 = vmatprep.subr.mxu0 0.0
    %110 = vmatpush1.msra.mxu0 0.0
    %111 = vmatprep.subr.mxu0 0.0
    %112 = vmatpush1.msra.mxu0 0.0
    %113 = vmatprep.subr.mxu0 0.0
    %114 = vmatpush1.msra.mxu0 0.0
    %115 = vmatprep.subr.mxu0 0.0
    %116 = vmatpush1.msra.mxu0 0.0
    %117 = vmatprep.subr.mxu0 0.0
    %118 = vmatpush1.msra.mxu0 0.0
    %119 = vmatprep.subr.mxu0 0.0
    %120 = vmatpush1.msra.mxu0 0.0
    %121 = vmatprep.subr.mxu0 0.0
    %122 = vmatpush1.msra.mxu0 0.0
    %123 = vmatprep.subr.mxu0 0.0
    %124 = vmatpush1.msra.mxu0 0.0
    %125 = vmatprep.subr.mxu0 0.0
    %126 = vmatpush1.msra.mxu0 0.0
    %127 = vmatprep.subr.mxu0 0.0
    %128 = vmatpush1.msra.mxu0 0.0
    %129 = vmatprep.subr.mxu0 0.0
    %130 = vmatpush1.msra.mxu0 0.0
    %131 = vmatprep.subr.mxu0 0.0
    %132 = vmatpush1.msra.mxu0 0.0
    %133 = vmatprep.subr.mxu0 0.0
    %134 = vmatpush1.msra.mxu0 0.0
    %135 = vmatprep.subr.mxu0 0.0
    %136 = vmatpush1.msra.mxu0 0.0
    %137 = vmatprep.subr.mxu0 0.0
    %138 = vmatpush1.msra.mxu0 0.0
    %139 = vmatprep.subr.mxu0 0.0
    %140 = vmatpush1.msra.mxu0 0.0
    %141 = vmatprep.subr.mxu0 0.0
    %142 = vmatpush1.msra.mxu0 0.0
    %143 = vmatprep.subr.mxu0 0.0
    %144 = vmatpush1.msra.mxu0 0.0
    %145 = vmatprep.subr.mxu0 0.0
    %146 = vmatpush1.msra.mxu0 0.0
    %147 = vmatprep.subr.mxu0 0.0
    %148 = vmatpush1.msra.mxu0 0.0
    %149 = vmatprep.subr.mxu0 0.0
    %150 = vmatpush1.msra.mxu0 0.0
    %151 = vmatprep.mubr.f32.mxu0 0.0
    %v152 = vand.u32 %v67, 4294901760
    %v153 = vsub.f32 %v67, %v152
    %v154 = vand.u32 %v153, 4294901760
    %v155 = vsub.f32 %v153, %v154
    %v156 = vand.u32 %v155, 4294901760
    %157 = vmatmul.mubr.f32.gmra.mrb[0].mxu0 %v156
    %v158 = vpop.f32.mrb[0].mxu0
    %v159 = vadd.f32 %v63, %v158
    %v160 = vpop.f32.mrb[0].mxu0
    %161 = vmatprep.mubr.f32.mxu0 0.0
    %v162 = vand.u32 %v70, 4294901760
    %v163 = vsub.f32 %v70, %v162
    %v164 = vand.u32 %v163, 4294901760
    %v165 = vsub.f32 %v163, %v164
    %v166 = vand.u32 %v165, 4294901760
    %167 = vmatmul.mubr.f32.gmra.mrb[0].mxu0 %v166
    %v168 = vpop.f32.mrb[0].mxu0
    %v169 = vadd.f32 %v63, %v168
    %v170 = vpop.f32.mrb[0].mxu0
    %171 = vdwg.mxu0
    %172 = vmatprep.subr.mxu0 0.0
    %v173 = vand.u32 %v47, 4294901760
    %v174 = vsub.f32 %v47, %v173
    %v175 = vand.u32 %v174, 4294901760
    %v176 = vsub.f32 %v174, %v175
    %v177 = vand.u32 %v176, 4294901760
    %178 = vmatpush1.msra.mxu0 %v177
    %179 = vmatprep.subr.mxu0 0.0
    %v180 = vand.u32 %v48, 4294901760
    %v181 = vsub.f32 %v48, %v180
    %v182 = vand.u32 %v181, 4294901760
    %v183 = vsub.f32 %v181, %v182
    %v184 = vand.u32 %v183, 4294901760
    %185 = vmatpush1.msra.mxu0 %v184
    %186 = vmatprep.subr.mxu0 0.0
    %v187 = vand.u32 %v49, 4294901760
    %v188 = vsub.f32 %v49, %v187
    %v189 = vand.u32 %v188, 4294901760
    %v190 = vsub.f32 %v188, %v189
    %v191 = vand.u32 %v190, 4294901760
    %192 = vmatpush1.msra.mxu0 %v191
    %193 = vmatprep.subr.mxu0 0.0
    %v194 = vand.u32 %v50, 4294901760
    %v195 = vsub.f32 %v50, %v194
    %v196 = vand.u32 %v195, 4294901760
    %v197 = vsub.f32 %v195, %v196
    %v198 = vand.u32 %v197, 4294901760
    %199 = vmatpush1.msra.mxu0 %v198
    %200 = vmatprep.subr.mxu0 0.0
    %v201 = vand.u32 %v51, 4294901760
    %v202 = vsub.f32 %v51, %v201
    %v203 = vand.u32 %v202, 4294901760
    %v204 = vsub.f32 %v202, %v203
    %v205 = vand.u32 %v204, 4294901760
    %206 = vmatpush1.msra.mxu0 %v205
    %207 = vmatprep.subr.mxu0 0.0
    %v208 = vand.u32 %v52, 4294901760
    %v209 = vsub.f32 %v52, %v208
    %v210 = vand.u32 %v209, 4294901760
    %v211 = vsub.f32 %v209, %v210
    %v212 = vand.u32 %v211, 4294901760
    %213 = vmatpush1.msra.mxu0 %v212
    %214 = vmatprep.subr.mxu0 0.0
    %v215 = vand.u32 %v53, 4294901760
    %v216 = vsub.f32 %v53, %v215
    %v217 = vand.u32 %v216, 4294901760
    %v218 = vsub.f32 %v216, %v217
    %v219 = vand.u32 %v218, 4294901760
    %220 = vmatpush1.msra.mxu0 %v219
    %221 = vmatprep.subr.mxu0 0.0
    %v222 = vand.u32 %v54, 4294901760
    %v223 = vsub.f32 %v54, %v222
    %v224 = vand.u32 %v223, 4294901760
    %v225 = vsub.f32 %v223, %v224
    %v226 = vand.u32 %v225, 4294901760
    %227 = vmatpush1.msra.mxu0 %v226
    %228 = vmatprep.subr.mxu0 0.0
    %v229 = vand.u32 %v55, 4294901760
    %v230 = vsub.f32 %v55, %v229
    %v231 = vand.u32 %v230, 4294901760
    %v232 = vsub.f32 %v230, %v231
    %v233 = vand.u32 %v232, 4294901760
    %234 = vmatpush1.msra.mxu0 %v233
    %235 = vmatprep.subr.mxu0 0.0
    %v236 = vand.u32 %v56, 4294901760
    %v237 = vsub.f32 %v56, %v236
    %v238 = vand.u32 %v237, 4294901760
    %v239 = vsub.f32 %v237, %v238
    %v240 = vand.u32 %v239, 4294901760
    %241 = vmatpush1.msra.mxu0 %v240
    %242 = vmatprep.subr.mxu0 0.0
    %v243 = vand.u32 %v74, 4294901760
    %v244 = vsub.f32 %v74, %v243
    %v245 = vand.u32 %v244, 4294901760
    %v246 = vsub.f32 %v244, %v245
    %v247 = vand.u32 %v246, 4294901760
    %248 = vmatpush1.msra.mxu0 %v247
    %249 = vmatprep.subr.mxu0 0.0
    %250 = vmatpush1.msra.mxu0 0.0
    %251 = vmatprep.subr.mxu0 0.0
    %252 = vmatpush1.msra.mxu0 0.0
    %253 = vmatprep.subr.mxu0 0.0
    %254 = vmatpush1.msra.mxu0 0.0
    %255 = vmatprep.subr.mxu0 0.0
    %256 = vmatpush1.msra.mxu0 0.0
    %257 = vmatprep.subr.mxu0 0.0
    %258 = vmatpush1.msra.mxu0 0.0
    %259 = vmatprep.subr.mxu0 0.0
    %260 = vmatpush1.msra.mxu0 0.0
    %261 = vmatprep.subr.mxu0 0.0
    %262 = vmatpush1.msra.mxu0 0.0
    %263 = vmatprep.subr.mxu0 0.0
    %264 = vmatpush1.msra.mxu0 0.0
    %265 = vmatprep.subr.mxu0 0.0
    %266 = vmatpush1.msra.mxu0 0.0
    %267 = vmatprep.subr.mxu0 0.0
    %268 = vmatpush1.msra.mxu0 0.0
    %269 = vmatprep.subr.mxu0 0.0
    %270 = vmatpush1.msra.mxu0 0.0
    %271 = vmatprep.subr.mxu0 0.0
    %272 = vmatpush1.msra.mxu0 0.0
    %273 = vmatprep.subr.mxu0 0.0
    %274 = vmatpush1.msra.mxu0 0.0
    %275 = vmatprep.subr.mxu0 0.0
    %276 = vmatpush1.msra.mxu0 0.0
    %277 = vmatprep.subr.mxu0 0.0
    %278 = vmatpush1.msra.mxu0 0.0
    %279 = vmatprep.subr.mxu0 0.0
    %280 = vmatpush1.msra.mxu0 0.0
    %281 = vmatprep.subr.mxu0 0.0
    %282 = vmatpush1.msra.mxu0 0.0
    %283 = vmatprep.subr.mxu0 0.0
    %284 = vmatpush1.msra.mxu0 0.0
    %285 = vmatprep.subr.mxu0 0.0
    %286 = vmatpush1.msra.mxu0 0.0
    %287 = vmatprep.subr.mxu0 0.0
    %288 = vmatpush1.msra.mxu0 0.0
    %289 = vmatprep.subr.mxu0 0.0
    %290 = vmatpush1.msra.mxu0 0.0
    %291 = vmatprep.mubr.f32.mxu0 0.0
    %v292 = vand.u32 %v67, 4294901760
    %293 = vmatmul.mubr.f32.gmra.mrb[0].mxu0 %v292
    %v294 = vpop.f32.mrb[0].mxu0
    %v295 = vadd.f32 %v159, %v294
    %v296 = vpop.f32.mrb[0].mxu0
    %297 = vmatprep.mubr.f32.mxu0 0.0
    %v298 = vand.u32 %v70, 4294901760
    %299 = vmatmul.mubr.f32.gmra.mrb[0].mxu0 %v298
    %v300 = vpop.f32.mrb[0].mxu0
    %v301 = vadd.f32 %v169, %v300
    %v302 = vpop.f32.mrb[0].mxu0
    %303 = vdwg.mxu0
    %304 = vmatprep.subr.mxu0 0.0
    %v305 = vand.u32 %v47, 4294901760
    %v306 = vsub.f32 %v47, %v305
    %307 = vmatpush1.msra.mxu0 %v306
    %308 = vmatprep.subr.mxu0 0.0
    %v309 = vand.u32 %v48, 4294901760
    %v310 = vsub.f32 %v48, %v309
    %311 = vmatpush1.msra.mxu0 %v310
    %312 = vmatprep.subr.mxu0 0.0
    %v313 = vand.u32 %v49, 4294901760
    %v314 = vsub.f32 %v49, %v313
    %315 = vmatpush1.msra.mxu0 %v314
    %316 = vmatprep.subr.mxu0 0.0
    %v317 = vand.u32 %v50, 4294901760
    %v318 = vsub.f32 %v50, %v317
    %319 = vmatpush1.msra.mxu0 %v318
    %320 = vmatprep.subr.mxu0 0.0
    %v321 = vand.u32 %v51, 4294901760
    %v322 = vsub.f32 %v51, %v321
    %323 = vmatpush1.msra.mxu0 %v322
    %324 = vmatprep.subr.mxu0 0.0
    %v325 = vand.u32 %v52, 4294901760
    %v326 = vsub.f32 %v52, %v325
    %327 = vmatpush1.msra.mxu0 %v326
    %328 = vmatprep.subr.mxu0 0.0
    %v329 = vand.u32 %v53, 4294901760
    %v330 = vsub.f32 %v53, %v329
    %331 = vmatpush1.msra.mxu0 %v330
    %332 = vmatprep.subr.mxu0 0.0
    %v333 = vand.u32 %v54, 4294901760
    %v334 = vsub.f32 %v54, %v333
    %335 = vmatpush1.msra.mxu0 %v334
    %336 = vmatprep.subr.mxu0 0.0
    %v337 = vand.u32 %v55, 4294901760
    %v338 = vsub.f32 %v55, %v337
    %339 = vmatpush1.msra.mxu0 %v338
    %340 = vmatprep.subr.mxu0 0.0
    %v341 = vand.u32 %v56, 4294901760
    %v342 = vsub.f32 %v56, %v341
    %343 = vmatpush1.msra.mxu0 %v342
    %344 = vmatprep.subr.mxu0 0.0
    %v345 = vand.u32 %v74, 4294901760
    %v346 = vsub.f32 %v74, %v345
    %347 = vmatpush1.msra.mxu0 %v346
    %348 = vmatprep.subr.mxu0 0.0
    %349 = vmatpush1.msra.mxu0 0.0
    %350 = vmatprep.subr.mxu0 0.0
    %351 = vmatpush1.msra.mxu0 0.0
    %352 = vmatprep.subr.mxu0 0.0
    %353 = vmatpush1.msra.mxu0 0.0
    %354 = vmatprep.subr.mxu0 0.0
    %355 = vmatpush1.msra.mxu0 0.0
    %356 = vmatprep.subr.mxu0 0.0
    %357 = vmatpush1.msra.mxu0 0.0
    %358 = vmatprep.subr.mxu0 0.0
    %359 = vmatpush1.msra.mxu0 0.0
    %360 = vmatprep.subr.mxu0 0.0
    %361 = vmatpush1.msra.mxu0 0.0
    %362 = vmatprep.subr.mxu0 0.0
    %363 = vmatpush1.msra.mxu0 0.0
    %364 = vmatprep.subr.mxu0 0.0
    %365 = vmatpush1.msra.mxu0 0.0
    %366 = vmatprep.subr.mxu0 0.0
    %367 = vmatpush1.msra.mxu0 0.0
    %368 = vmatprep.subr.mxu0 0.0
    %369 = vmatpush1.msra.mxu0 0.0
    %370 = vmatprep.subr.mxu0 0.0
    %371 = vmatpush1.msra.mxu0 0.0
    %372 = vmatprep.subr.mxu0 0.0
    %373 = vmatpush1.msra.mxu0 0.0
    %374 = vmatprep.subr.mxu0 0.0
    %375 = vmatpush1.msra.mxu0 0.0
    %376 = vmatprep.subr.mxu0 0.0
    %377 = vmatpush1.msra.mxu0 0.0
    %378 = vmatprep.subr.mxu0 0.0
    %379 = vmatpush1.msra.mxu0 0.0
    %380 = vmatprep.subr.mxu0 0.0
    %381 = vmatpush1.msra.mxu0 0.0
    %382 = vmatprep.subr.mxu0 0.0
    %383 = vmatpush1.msra.mxu0 0.0
    %384 = vmatprep.subr.mxu0 0.0
    %385 = vmatpush1.msra.mxu0 0.0
    %386 = vmatprep.subr.mxu0 0.0
    %387 = vmatpush1.msra.mxu0 0.0
    %388 = vmatprep.subr.mxu0 0.0
    %389 = vmatpush1.msra.mxu0 0.0
    %390 = vmatprep.mubr.f32.mxu0 0.0
    %v391 = vand.u32 %v67, 4294901760
    %v392 = vsub.f32 %v67, %v391
    %393 = vmatmul.mubr.f32.gmra.mrb[0].mxu0 %v392
    %v394 = vpop.f32.mrb[0].mxu0
    %v395 = vadd.f32 %v295, %v394
    %v396 = vpop.f32.mrb[0].mxu0
    %397 = vmatprep.mubr.f32.mxu0 0.0
    %v398 = vand.u32 %v70, 4294901760
    %v399 = vsub.f32 %v70, %v398
    %400 = vmatmul.mubr.f32.gmra.mrb[0].mxu0 %v399
    %v401 = vpop.f32.mrb[0].mxu0
    %v402 = vadd.f32 %v301, %v401
    %v403 = vpop.f32.mrb[0].mxu0
    %404 = vdwg.mxu0
    %405 = vmatprep.subr.mxu0 0.0
    %v406 = vand.u32 %v47, 4294901760
    %407 = vmatpush1.msra.mxu0 %v406
    %408 = vmatprep.subr.mxu0 0.0
    %v409 = vand.u32 %v48, 4294901760
    %410 = vmatpush1.msra.mxu0 %v409
    %411 = vmatprep.subr.mxu0 0.0
    %v412 = vand.u32 %v49, 4294901760
    %413 = vmatpush1.msra.mxu0 %v412
    %414 = vmatprep.subr.mxu0 0.0
    %v415 = vand.u32 %v50, 4294901760
    %416 = vmatpush1.msra.mxu0 %v415
    %417 = vmatprep.subr.mxu0 0.0
    %v418 = vand.u32 %v51, 4294901760
    %419 = vmatpush1.msra.mxu0 %v418
    %420 = vmatprep.subr.mxu0 0.0
    %v421 = vand.u32 %v52, 4294901760
    %422 = vmatpush1.msra.mxu0 %v421
    %423 = vmatprep.subr.mxu0 0.0
    %v424 = vand.u32 %v53, 4294901760
    %425 = vmatpush1.msra.mxu0 %v424
    %426 = vmatprep.subr.mxu0 0.0
    %v427 = vand.u32 %v54, 4294901760
    %428 = vmatpush1.msra.mxu0 %v427
    %429 = vmatprep.subr.mxu0 0.0
    %v430 = vand.u32 %v55, 4294901760
    %431 = vmatpush1.msra.mxu0 %v430
    %432 = vmatprep.subr.mxu0 0.0
    %v433 = vand.u32 %v56, 4294901760
    %434 = vmatpush1.msra.mxu0 %v433
    %435 = vmatprep.subr.mxu0 0.0
    %v436 = vand.u32 %v74, 4294901760
    %437 = vmatpush1.msra.mxu0 %v436
    %438 = vmatprep.subr.mxu0 0.0
    %439 = vmatpush1.msra.mxu0 0.0
    %440 = vmatprep.subr.mxu0 0.0
    %441 = vmatpush1.msra.mxu0 0.0
    %442 = vmatprep.subr.mxu0 0.0
    %443 = vmatpush1.msra.mxu0 0.0
    %444 = vmatprep.subr.mxu0 0.0
    %445 = vmatpush1.msra.mxu0 0.0
    %446 = vmatprep.subr.mxu0 0.0
    %447 = vmatpush1.msra.mxu0 0.0
    %448 = vmatprep.subr.mxu0 0.0
    %449 = vmatpush1.msra.mxu0 0.0
    %450 = vmatprep.subr.mxu0 0.0
    %451 = vmatpush1.msra.mxu0 0.0
    %452 = vmatprep.subr.mxu0 0.0
    %453 = vmatpush1.msra.mxu0 0.0
    %454 = vmatprep.subr.mxu0 0.0
    %455 = vmatpush1.msra.mxu0 0.0
    %456 = vmatprep.subr.mxu0 0.0
    %457 = vmatpush1.msra.mxu0 0.0
    %458 = vmatprep.subr.mxu0 0.0
    %459 = vmatpush1.msra.mxu0 0.0
    %460 = vmatprep.subr.mxu0 0.0
    %461 = vmatpush1.msra.mxu0 0.0
    %462 = vmatprep.subr.mxu0 0.0
    %463 = vmatpush1.msra.mxu0 0.0
    %464 = vmatprep.subr.mxu0 0.0
    %465 = vmatpush1.msra.mxu0 0.0
    %466 = vmatprep.subr.mxu0 0.0
    %467 = vmatpush1.msra.mxu0 0.0
    %468 = vmatprep.subr.mxu0 0.0
    %469 = vmatpush1.msra.mxu0 0.0
    %470 = vmatprep.subr.mxu0 0.0
    %471 = vmatpush1.msra.mxu0 0.0
    %472 = vmatprep.subr.mxu0 0.0
    %473 = vmatpush1.msra.mxu0 0.0
    %474 = vmatprep.subr.mxu0 0.0
    %475 = vmatpush1.msra.mxu0 0.0
    %476 = vmatprep.subr.mxu0 0.0
    %477 = vmatpush1.msra.mxu0 0.0
    %478 = vmatprep.subr.mxu0 0.0
    %479 = vmatpush1.msra.mxu0 0.0
    %480 = vmatprep.mubr.f32.mxu0 0.0
    %v481 = vand.u32 %v67, 4294901760
    %v482 = vsub.f32 %v67, %v481
    %v483 = vand.u32 %v482, 4294901760
    %484 = vmatmul.mubr.f32.gmra.mrb[0].mxu0 %v483
    %v485 = vpop.f32.mrb[0].mxu0
    %v486 = vadd.f32 %v395, %v485
    %v487 = vpop.f32.mrb[0].mxu0
    %488 = vmatprep.mubr.f32.mxu0 0.0
    %v489 = vand.u32 %v70, 4294901760
    %v490 = vsub.f32 %v70, %v489
    %v491 = vand.u32 %v490, 4294901760
    %492 = vmatmul.mubr.f32.gmra.mrb[0].mxu0 %v491
    %v493 = vpop.f32.mrb[0].mxu0
    %v494 = vadd.f32 %v402, %v493
    %v495 = vpop.f32.mrb[0].mxu0
    %496 = vdwg.mxu0
    %497 = vmatprep.subr.mxu0 0.0
    %v498 = vand.u32 %v47, 4294901760
    %v499 = vsub.f32 %v47, %v498
    %v500 = vand.u32 %v499, 4294901760
    %501 = vmatpush1.msra.mxu0 %v500
    %502 = vmatprep.subr.mxu0 0.0
    %v503 = vand.u32 %v48, 4294901760
    %v504 = vsub.f32 %v48, %v503
    %v505 = vand.u32 %v504, 4294901760
    %506 = vmatpush1.msra.mxu0 %v505
    %507 = vmatprep.subr.mxu0 0.0
    %v508 = vand.u32 %v49, 4294901760
    %v509 = vsub.f32 %v49, %v508
    %v510 = vand.u32 %v509, 4294901760
    %511 = vmatpush1.msra.mxu0 %v510
    %512 = vmatprep.subr.mxu0 0.0
    %v513 = vand.u32 %v50, 4294901760
    %v514 = vsub.f32 %v50, %v513
    %v515 = vand.u32 %v514, 4294901760
    %516 = vmatpush1.msra.mxu0 %v515
    %517 = vmatprep.subr.mxu0 0.0
    %v518 = vand.u32 %v51, 4294901760
    %v519 = vsub.f32 %v51, %v518
    %v520 = vand.u32 %v519, 4294901760
    %521 = vmatpush1.msra.mxu0 %v520
    %522 = vmatprep.subr.mxu0 0.0
    %v523 = vand.u32 %v52, 4294901760
    %v524 = vsub.f32 %v52, %v523
    %v525 = vand.u32 %v524, 4294901760
    %526 = vmatpush1.msra.mxu0 %v525
    %527 = vmatprep.subr.mxu0 0.0
    %v528 = vand.u32 %v53, 4294901760
    %v529 = vsub.f32 %v53, %v528
    %v530 = vand.u32 %v529, 4294901760
    %531 = vmatpush1.msra.mxu0 %v530
    %532 = vmatprep.subr.mxu0 0.0
    %v533 = vand.u32 %v54, 4294901760
    %v534 = vsub.f32 %v54, %v533
    %v535 = vand.u32 %v534, 4294901760
    %536 = vmatpush1.msra.mxu0 %v535
    %537 = vmatprep.subr.mxu0 0.0
    %v538 = vand.u32 %v55, 4294901760
    %v539 = vsub.f32 %v55, %v538
    %v540 = vand.u32 %v539, 4294901760
    %541 = vmatpush1.msra.mxu0 %v540
    %542 = vmatprep.subr.mxu0 0.0
    %v543 = vand.u32 %v56, 4294901760
    %v544 = vsub.f32 %v56, %v543
    %v545 = vand.u32 %v544, 4294901760
    %546 = vmatpush1.msra.mxu0 %v545
    %547 = vmatprep.subr.mxu0 0.0
    %v548 = vand.u32 %v74, 4294901760
    %v549 = vsub.f32 %v74, %v548
    %v550 = vand.u32 %v549, 4294901760
    %551 = vmatpush1.msra.mxu0 %v550
    %552 = vmatprep.subr.mxu0 0.0
    %553 = vmatpush1.msra.mxu0 0.0
    %554 = vmatprep.subr.mxu0 0.0
    %555 = vmatpush1.msra.mxu0 0.0
    %556 = vmatprep.subr.mxu0 0.0
    %557 = vmatpush1.msra.mxu0 0.0
    %558 = vmatprep.subr.mxu0 0.0
    %559 = vmatpush1.msra.mxu0 0.0
    %560 = vmatprep.subr.mxu0 0.0
    %561 = vmatpush1.msra.mxu0 0.0
    %562 = vmatprep.subr.mxu0 0.0
    %563 = vmatpush1.msra.mxu0 0.0
    %564 = vmatprep.subr.mxu0 0.0
    %565 = vmatpush1.msra.mxu0 0.0
    %566 = vmatprep.subr.mxu0 0.0
    %567 = vmatpush1.msra.mxu0 0.0
    %568 = vmatprep.subr.mxu0 0.0
    %569 = vmatpush1.msra.mxu0 0.0
    %570 = vmatprep.subr.mxu0 0.0
    %571 = vmatpush1.msra.mxu0 0.0
    %572 = vmatprep.subr.mxu0 0.0
    %573 = vmatpush1.msra.mxu0 0.0
    %574 = vmatprep.subr.mxu0 0.0
    %575 = vmatpush1.msra.mxu0 0.0
    %576 = vmatprep.subr.mxu0 0.0
    %577 = vmatpush1.msra.mxu0 0.0
    %578 = vmatprep.subr.mxu0 0.0
    %579 = vmatpush1.msra.mxu0 0.0
    %580 = vmatprep.subr.mxu0 0.0
    %581 = vmatpush1.msra.mxu0 0.0
    %582 = vmatprep.subr.mxu0 0.0
    %583 = vmatpush1.msra.mxu0 0.0
    %584 = vmatprep.subr.mxu0 0.0
    %585 = vmatpush1.msra.mxu0 0.0
    %586 = vmatprep.subr.mxu0 0.0
    %587 = vmatpush1.msra.mxu0 0.0
    %588 = vmatprep.subr.mxu0 0.0
    %589 = vmatpush1.msra.mxu0 0.0
    %590 = vmatprep.subr.mxu0 0.0
    %591 = vmatpush1.msra.mxu0 0.0
    %592 = vmatprep.subr.mxu0 0.0
    %593 = vmatpush1.msra.mxu0 0.0
    %594 = vmatprep.mubr.f32.mxu0 0.0
    %v595 = vand.u32 %v67, 4294901760
    %596 = vmatmul.mubr.f32.gmra.mrb[0].mxu0 %v595
    %v597 = vpop.f32.mrb[0].mxu0
    %v598 = vadd.f32 %v486, %v597
    %v599 = vpop.f32.mrb[0].mxu0
    %600 = vmatprep.mubr.f32.mxu0 0.0
    %v601 = vand.u32 %v70, 4294901760
    %602 = vmatmul.mubr.f32.gmra.mrb[0].mxu0 %v601
    %v603 = vpop.f32.mrb[0].mxu0
    %v604 = vadd.f32 %v494, %v603
    %v605 = vpop.f32.mrb[0].mxu0
    %606 = vdwg.mxu0
    %607 = vmatprep.subr.mxu0 0.0
    %v608 = vand.u32 %v47, 4294901760
    %609 = vmatpush1.msra.mxu0 %v608
    %610 = vmatprep.subr.mxu0 0.0
    %v611 = vand.u32 %v48, 4294901760
    %612 = vmatpush1.msra.mxu0 %v611
    %613 = vmatprep.subr.mxu0 0.0
    %v614 = vand.u32 %v49, 4294901760
    %615 = vmatpush1.msra.mxu0 %v614
    %616 = vmatprep.subr.mxu0 0.0
    %v617 = vand.u32 %v50, 4294901760
    %618 = vmatpush1.msra.mxu0 %v617
    %619 = vmatprep.subr.mxu0 0.0
    %v620 = vand.u32 %v51, 4294901760
    %621 = vmatpush1.msra.mxu0 %v620
    %622 = vmatprep.subr.mxu0 0.0
    %v623 = vand.u32 %v52, 4294901760
    %624 = vmatpush1.msra.mxu0 %v623
    %625 = vmatprep.subr.mxu0 0.0
    %v626 = vand.u32 %v53, 4294901760
    %627 = vmatpush1.msra.mxu0 %v626
    %628 = vmatprep.subr.mxu0 0.0
    %v629 = vand.u32 %v54, 4294901760
    %630 = vmatpush1.msra.mxu0 %v629
    %631 = vmatprep.subr.mxu0 0.0
    %v632 = vand.u32 %v55, 4294901760
    %633 = vmatpush1.msra.mxu0 %v632
    %634 = vmatprep.subr.mxu0 0.0
    %v635 = vand.u32 %v56, 4294901760
    %636 = vmatpush1.msra.mxu0 %v635
    %637 = vmatprep.subr.mxu0 0.0
    %v638 = vand.u32 %v74, 4294901760
    %639 = vmatpush1.msra.mxu0 %v638
    %640 = vmatprep.subr.mxu0 0.0
    %641 = vmatpush1.msra.mxu0 0.0
    %642 = vmatprep.subr.mxu0 0.0
    %643 = vmatpush1.msra.mxu0 0.0
    %644 = vmatprep.subr.mxu0 0.0
    %645 = vmatpush1.msra.mxu0 0.0
    %646 = vmatprep.subr.mxu0 0.0
    %647 = vmatpush1.msra.mxu0 0.0
    %648 = vmatprep.subr.mxu0 0.0
    %649 = vmatpush1.msra.mxu0 0.0
    %650 = vmatprep.subr.mxu0 0.0
    %651 = vmatpush1.msra.mxu0 0.0
    %652 = vmatprep.subr.mxu0 0.0
    %653 = vmatpush1.msra.mxu0 0.0
    %654 = vmatprep.subr.mxu0 0.0
    %655 = vmatpush1.msra.mxu0 0.0
    %656 = vmatprep.subr.mxu0 0.0
    %657 = vmatpush1.msra.mxu0 0.0
    %658 = vmatprep.subr.mxu0 0.0
    %659 = vmatpush1.msra.mxu0 0.0
    %660 = vmatprep.subr.mxu0 0.0
    %661 = vmatpush1.msra.mxu0 0.0
    %662 = vmatprep.subr.mxu0 0.0
    %663 = vmatpush1.msra.mxu0 0.0
    %664 = vmatprep.subr.mxu0 0.0
    %665 = vmatpush1.msra.mxu0 0.0
    %666 = vmatprep.subr.mxu0 0.0
    %667 = vmatpush1.msra.mxu0 0.0
    %668 = vmatprep.subr.mxu0 0.0
    %669 = vmatpush1.msra.mxu0 0.0
    %670 = vmatprep.subr.mxu0 0.0
    %671 = vmatpush1.msra.mxu0 0.0
    %672 = vmatprep.subr.mxu0 0.0
    %673 = vmatpush1.msra.mxu0 0.0
    %674 = vmatprep.subr.mxu0 0.0
    %675 = vmatpush1.msra.mxu0 0.0
    %676 = vmatprep.subr.mxu0 0.0
    %677 = vmatpush1.msra.mxu0 0.0
    %678 = vmatprep.subr.mxu0 0.0
    %679 = vmatpush1.msra.mxu0 0.0
    %680 = vmatprep.subr.mxu0 0.0
    %681 = vmatpush1.msra.mxu0 0.0
    %682 = vmatprep.mubr.f32.mxu0 0.0
    %v683 = vand.u32 %v67, 4294901760
    %684 = vmatmul.mubr.f32.gmra.mrb[0].mxu0 %v683
    %v685 = vpop.f32.mrb[0].mxu0
    %v686 = vadd.f32 %v598, %v685
    %v687 = vpop.f32.mrb[0].mxu0
    %688 = vmatprep.mubr.f32.mxu0 0.0
    %v689 = vand.u32 %v70, 4294901760
    %690 = vmatmul.mubr.f32.gmra.mrb[0].mxu0 %v689
    %v691 = vpop.f32.mrb[0].mxu0
    %v692 = vadd.f32 %v604, %v691
    %v693 = vpop.f32.mrb[0].mxu0
    %694 = vdwg.mxu0
    %v695 = vld [vmem:[%s1] sm:$0xff]
    %v696 = vld [vmem:[%s1 + $0x8] sm:$0xff]
    %v697 = vld [vmem:[%s4] sm:$0x1]
    %699 = vset.pattern.permute.xlu0 0
    %700 = vperm.xlu0 %699, %v695
    %v701 = vpop.permute.xlu0 %700
    %704 = vset.pattern.permute.xlu0 0
    %705 = vperm.xlu0 %704, %v696
    %v706 = vpop.permute.xlu0 %705
    %v708 = vlaneseq
    %v709 = vshrl.u32 %v708, 7
    %v710 = vsub.s32 0, %v709
    %v711 = vrot.slane %v697, %v710
    %v712 = vmul.f32 %v701, %v711
    %v713 = vmul.f32 %v706, %v711
    %v714 = vld [vmem:[%s4 + $0x1] sm:$0x1]
    %715 = vset.pattern.permute.xlu0 1
    %716 = vperm.xlu0 %715, %v695
    %v717 = vpop.permute.xlu0 %716
    %719 = vset.pattern.permute.xlu0 1
    %720 = vperm.xlu0 %719, %v696
    %v721 = vpop.permute.xlu0 %720
    %v723 = vlaneseq
    %v724 = vshrl.u32 %v723, 7
    %v725 = vsub.s32 0, %v724
    %v726 = vrot.slane %v714, %v725
    %v727 = vmul.f32 %v717, %v726
    %v728 = vmul.f32 %v721, %v726
    %v729 = vadd.f32 %v712, %v727
    %v730 = vadd.f32 %v713, %v728
    %v731 = vld [vmem:[%s5] sm:$0x1]
    %v733 = vlaneseq
    %v734 = vshrl.u32 %v733, 7
    %v735 = vsub.s32 0, %v734
    %v736 = vrot.slane %v731, %v735
    %v738 = vadd.f32 %v729, %v736
    %v739 = vadd.f32 %v730, %v736
    %v740 = vld [vmem:[%s6] sm:$0x1]
    %v741 = vld [vmem:[%s7] sm:$0x1]
    %vm742 = vcmask 171008
    %v743 = vsel %vm742, %v738, 0.0
    %744 = vadd.xlane.f32.xlu0 %v743
    %v745 = vpop.xlane.xlu0 %744
    %v746 = vsel %vm742, %v739, 0.0
    %747 = vadd.xlane.f32.xlu0 %v746
    %v748 = vpop.xlane.xlu0 %747
    %v749 = vrcp.pop 21.0
    %v750 = vmul.f32 %v745, %v749
    %v751 = vmul.f32 %v748, %v749
    %v752 = vsub.f32 %v738, %v750
    %v753 = vsub.f32 %v739, %v751
    %v754 = vmul.f32 %v752, %v752
    %v755 = vmul.f32 %v753, %v753
    %v756 = vsel %vm742, %v754, 0.0
    %757 = vadd.xlane.f32.xlu0 %v756
    %v758 = vpop.xlane.xlu0 %757
    %v759 = vsel %vm742, %v755, 0.0
    %760 = vadd.xlane.f32.xlu0 %v759
    %v761 = vpop.xlane.xlu0 %760
    %v762 = vmul.f32 %v758, %v749
    %v763 = vmul.f32 %v761, %v749
    %v764 = vadd.f32 %v762, 1e-05
    %v765 = vadd.f32 %v763, 1e-05
    %v766 = vrsqrt.pop %v764
    %v767 = vrsqrt.pop %v765
    %v768 = vmul.f32 %v752, %v766
    %v769 = vmul.f32 %v753, %v767
    %v771 = vlaneseq
    %v772 = vshrl.u32 %v771, 7
    %v773 = vsub.s32 0, %v772
    %v774 = vrot.slane %v740, %v773
    %v776 = vmul.f32 %v768, %v774
    %v777 = vmul.f32 %v769, %v774
    %v779 = vlaneseq
    %v780 = vshrl.u32 %v779, 7
    %v781 = vsub.s32 0, %v780
    %v782 = vrot.slane %v741, %v781
    %v784 = vadd.f32 %v776, %v782
    %v785 = vadd.f32 %v777, %v782
    %v786 = vmax.f32 %v686, 0.0
    %v787 = vmax.f32 %v692, 0.0
    %v788 = vld [vmem:[%s8] sm:$0xff]
    %v789 = vld [vmem:[%s8 + $0x8] sm:$0xff]
    %v790 = vld [vmem:[%s8 + $0x10] sm:$0xff]
    %v791 = vld [vmem:[%s8 + $0x18] sm:$0xff]
    %v792 = vld [vmem:[%s8 + $0x20] sm:$0xff]
    %v793 = vld [vmem:[%s8 + $0x28] sm:$0xff]
    %v794 = vld [vmem:[%s8 + $0x30] sm:$0xff]
    %v795 = vld [vmem:[%s8 + $0x38] sm:$0xff]
    %v796 = vmax.f32 %v784, 0.0
    %v797 = vmax.f32 %v785, 0.0
    %v798 = vld [vmem:[%s9] sm:$0xff]
    %v799 = vld [vmem:[%s9 + $0x8] sm:$0xff]
    %v800 = vld [vmem:[%s9 + $0x10] sm:$0x1f]
    %v802 = vsel %vm742, %v796, 0
    %v805 = vsel %vm742, %v797, 0
    %vm807 = vcmask 1044480
    %v809 = vsel %vm807, %v800, 0
    %811 = vmatprep.subr.mxu0 0.0
    %v812 = vand.u32 %v798, 4294901760
    %813 = vmatpush1.msra.mxu0 %v812
    %814 = vmatprep.subr.mxu0 0.0
    %v815 = vand.u32 %v799, 4294901760
    %816 = vmatpush1.msra.mxu0 %v815
    %817 = vmatprep.subr.mxu0 0.0
    %v818 = vand.u32 %v809, 4294901760
    %819 = vmatpush1.msra.mxu0 %v818
    %820 = vmatprep.subr.mxu0 0.0
    %821 = vmatpush1.msra.mxu0 0.0
    %822 = vmatprep.subr.mxu0 0.0
    %823 = vmatpush1.msra.mxu0 0.0
    %824 = vmatprep.subr.mxu0 0.0
    %825 = vmatpush1.msra.mxu0 0.0
    %826 = vmatprep.subr.mxu0 0.0
    %827 = vmatpush1.msra.mxu0 0.0
    %828 = vmatprep.subr.mxu0 0.0
    %829 = vmatpush1.msra.mxu0 0.0
    %830 = vmatprep.subr.mxu0 0.0
    %831 = vmatpush1.msra.mxu0 0.0
    %832 = vmatprep.subr.mxu0 0.0
    %833 = vmatpush1.msra.mxu0 0.0
    %834 = vmatprep.subr.mxu0 0.0
    %835 = vmatpush1.msra.mxu0 0.0
    %836 = vmatprep.subr.mxu0 0.0
    %837 = vmatpush1.msra.mxu0 0.0
    %838 = vmatprep.subr.mxu0 0.0
    %839 = vmatpush1.msra.mxu0 0.0
    %840 = vmatprep.subr.mxu0 0.0
    %841 = vmatpush1.msra.mxu0 0.0
    %842 = vmatprep.subr.mxu0 0.0
    %843 = vmatpush1.msra.mxu0 0.0
    %844 = vmatprep.subr.mxu0 0.0
    %845 = vmatpush1.msra.mxu0 0.0
    %846 = vmatprep.subr.mxu0 0.0
    %847 = vmatpush1.msra.mxu0 0.0
    %848 = vmatprep.subr.mxu0 0.0
    %849 = vmatpush1.msra.mxu0 0.0
    %850 = vmatprep.subr.mxu0 0.0
    %851 = vmatpush1.msra.mxu0 0.0
    %852 = vmatprep.subr.mxu0 0.0
    %853 = vmatpush1.msra.mxu0 0.0
    %854 = vmatprep.subr.mxu0 0.0
    %855 = vmatpush1.msra.mxu0 0.0
    %856 = vmatprep.subr.mxu0 0.0
    %857 = vmatpush1.msra.mxu0 0.0
    %858 = vmatprep.subr.mxu0 0.0
    %859 = vmatpush1.msra.mxu0 0.0
    %860 = vmatprep.subr.mxu0 0.0
    %861 = vmatpush1.msra.mxu0 0.0
    %862 = vmatprep.subr.mxu0 0.0
    %863 = vmatpush1.msra.mxu0 0.0
    %864 = vmatprep.subr.mxu0 0.0
    %865 = vmatpush1.msra.mxu0 0.0
    %866 = vmatprep.subr.mxu0 0.0
    %867 = vmatpush1.msra.mxu0 0.0
    %868 = vmatprep.subr.mxu0 0.0
    %869 = vmatpush1.msra.mxu0 0.0
    %870 = vmatprep.subr.mxu0 0.0
    %871 = vmatpush1.msra.mxu0 0.0
    %872 = vmatprep.subr.mxu0 0.0
    %873 = vmatpush1.msra.mxu0 0.0
    %874 = vmatprep.subr.mxu0 0.0
    %875 = vmatpush1.msra.mxu0 0.0
    %876 = vmatprep.subr.mxu0 0.0
    %877 = vmatpush1.msra.mxu0 0.0
    %878 = vmatprep.mubr.f32.mxu0 0.0
    %v879 = vand.u32 %v802, 4294901760
    %v880 = vsub.f32 %v802, %v879
    %v881 = vand.u32 %v880, 4294901760
    %v882 = vsub.f32 %v880, %v881
    %v883 = vand.u32 %v882, 4294901760
    %884 = vmatmul.mubr.f32.gmra.mrb[0].mxu0 %v883
    %v885 = vpop.f32.mrb[0].mxu0
    %v886 = vadd.f32 0.0, %v885
    %v887 = vpop.f32.mrb[0].mxu0
    %888 = vmatprep.mubr.f32.mxu0 0.0
    %v889 = vand.u32 %v805, 4294901760
    %v890 = vsub.f32 %v805, %v889
    %v891 = vand.u32 %v890, 4294901760
    %v892 = vsub.f32 %v890, %v891
    %v893 = vand.u32 %v892, 4294901760
    %894 = vmatmul.mubr.f32.gmra.mrb[0].mxu0 %v893
    %v895 = vpop.f32.mrb[0].mxu0
    %v896 = vadd.f32 0.0, %v895
    %v897 = vpop.f32.mrb[0].mxu0
    %898 = vdwg.mxu0
    %899 = vmatprep.subr.mxu0 0.0
    %v900 = vand.u32 %v798, 4294901760
    %v901 = vsub.f32 %v798, %v900
    %v902 = vand.u32 %v901, 4294901760
    %v903 = vsub.f32 %v901, %v902
    %v904 = vand.u32 %v903, 4294901760
    %905 = vmatpush1.msra.mxu0 %v904
    %906 = vmatprep.subr.mxu0 0.0
    %v907 = vand.u32 %v799, 4294901760
    %v908 = vsub.f32 %v799, %v907
    %v909 = vand.u32 %v908, 4294901760
    %v910 = vsub.f32 %v908, %v909
    %v911 = vand.u32 %v910, 4294901760
    %912 = vmatpush1.msra.mxu0 %v911
    %913 = vmatprep.subr.mxu0 0.0
    %v914 = vand.u32 %v809, 4294901760
    %v915 = vsub.f32 %v809, %v914
    %v916 = vand.u32 %v915, 4294901760
    %v917 = vsub.f32 %v915, %v916
    %v918 = vand.u32 %v917, 4294901760
    %919 = vmatpush1.msra.mxu0 %v918
    %920 = vmatprep.subr.mxu0 0.0
    %921 = vmatpush1.msra.mxu0 0.0
    %922 = vmatprep.subr.mxu0 0.0
    %923 = vmatpush1.msra.mxu0 0.0
    %924 = vmatprep.subr.mxu0 0.0
    %925 = vmatpush1.msra.mxu0 0.0
    %926 = vmatprep.subr.mxu0 0.0
    %927 = vmatpush1.msra.mxu0 0.0
    %928 = vmatprep.subr.mxu0 0.0
    %929 = vmatpush1.msra.mxu0 0.0
    %930 = vmatprep.subr.mxu0 0.0
    %931 = vmatpush1.msra.mxu0 0.0
    %932 = vmatprep.subr.mxu0 0.0
    %933 = vmatpush1.msra.mxu0 0.0
    %934 = vmatprep.subr.mxu0 0.0
    %935 = vmatpush1.msra.mxu0 0.0
    %936 = vmatprep.subr.mxu0 0.0
    %937 = vmatpush1.msra.mxu0 0.0
    %938 = vmatprep.subr.mxu0 0.0
    %939 = vmatpush1.msra.mxu0 0.0
    %940 = vmatprep.subr.mxu0 0.0
    %941 = vmatpush1.msra.mxu0 0.0
    %942 = vmatprep.subr.mxu0 0.0
    %943 = vmatpush1.msra.mxu0 0.0
    %944 = vmatprep.subr.mxu0 0.0
    %945 = vmatpush1.msra.mxu0 0.0
    %946 = vmatprep.subr.mxu0 0.0
    %947 = vmatpush1.msra.mxu0 0.0
    %948 = vmatprep.subr.mxu0 0.0
    %949 = vmatpush1.msra.mxu0 0.0
    %950 = vmatprep.subr.mxu0 0.0
    %951 = vmatpush1.msra.mxu0 0.0
    %952 = vmatprep.subr.mxu0 0.0
    %953 = vmatpush1.msra.mxu0 0.0
    %954 = vmatprep.subr.mxu0 0.0
    %955 = vmatpush1.msra.mxu0 0.0
    %956 = vmatprep.subr.mxu0 0.0
    %957 = vmatpush1.msra.mxu0 0.0
    %958 = vmatprep.subr.mxu0 0.0
    %959 = vmatpush1.msra.mxu0 0.0
    %960 = vmatprep.subr.mxu0 0.0
    %961 = vmatpush1.msra.mxu0 0.0
    %962 = vmatprep.subr.mxu0 0.0
    %963 = vmatpush1.msra.mxu0 0.0
    %964 = vmatprep.subr.mxu0 0.0
    %965 = vmatpush1.msra.mxu0 0.0
    %966 = vmatprep.subr.mxu0 0.0
    %967 = vmatpush1.msra.mxu0 0.0
    %968 = vmatprep.subr.mxu0 0.0
    %969 = vmatpush1.msra.mxu0 0.0
    %970 = vmatprep.subr.mxu0 0.0
    %971 = vmatpush1.msra.mxu0 0.0
    %972 = vmatprep.subr.mxu0 0.0
    %973 = vmatpush1.msra.mxu0 0.0
    %974 = vmatprep.subr.mxu0 0.0
    %975 = vmatpush1.msra.mxu0 0.0
    %976 = vmatprep.subr.mxu0 0.0
    %977 = vmatpush1.msra.mxu0 0.0
    %978 = vmatprep.mubr.f32.mxu0 0.0
    %v979 = vand.u32 %v802, 4294901760
    %980 = vmatmul.mubr.f32.gmra.mrb[0].mxu0 %v979
    %v981 = vpop.f32.mrb[0].mxu0
    %v982 = vadd.f32 %v886, %v981
    %v983 = vpop.f32.mrb[0].mxu0
    %984 = vmatprep.mubr.f32.mxu0 0.0
    %v985 = vand.u32 %v805, 4294901760
    %986 = vmatmul.mubr.f32.gmra.mrb[0].mxu0 %v985
    %v987 = vpop.f32.mrb[0].mxu0
    %v988 = vadd.f32 %v896, %v987
    %v989 = vpop.f32.mrb[0].mxu0
    %990 = vdwg.mxu0
    %991 = vmatprep.subr.mxu0 0.0
    %v992 = vand.u32 %v798, 4294901760
    %v993 = vsub.f32 %v798, %v992
    %994 = vmatpush1.msra.mxu0 %v993
    %995 = vmatprep.subr.mxu0 0.0
    %v996 = vand.u32 %v799, 4294901760
    %v997 = vsub.f32 %v799, %v996
    %998 = vmatpush1.msra.mxu0 %v997
    %999 = vmatprep.subr.mxu0 0.0
    %v1000 = vand.u32 %v809, 4294901760
    %v1001 = vsub.f32 %v809, %v1000
    %1002 = vmatpush1.msra.mxu0 %v1001
    %1003 = vmatprep.subr.mxu0 0.0
    %1004 = vmatpush1.msra.mxu0 0.0
    %1005 = vmatprep.subr.mxu0 0.0
    %1006 = vmatpush1.msra.mxu0 0.0
    %1007 = vmatprep.subr.mxu0 0.0
    %1008 = vmatpush1.msra.mxu0 0.0
    %1009 = vmatprep.subr.mxu0 0.0
    %1010 = vmatpush1.msra.mxu0 0.0
    %1011 = vmatprep.subr.mxu0 0.0
    %1012 = vmatpush1.msra.mxu0 0.0
    %1013 = vmatprep.subr.mxu0 0.0
    %1014 = vmatpush1.msra.mxu0 0.0
    %1015 = vmatprep.subr.mxu0 0.0
    %1016 = vmatpush1.msra.mxu0 0.0
    %1017 = vmatprep.subr.mxu0 0.0
    %1018 = vmatpush1.msra.mxu0 0.0
    %1019 = vmatprep.subr.mxu0 0.0
    %1020 = vmatpush1.msra.mxu0 0.0
    %1021 = vmatprep.subr.mxu0 0.0
    %1022 = vmatpush1.msra.mxu0 0.0
    %1023 = vmatprep.subr.mxu0 0.0
    %1024 = vmatpush1.msra.mxu0 0.0
    %1025 = vmatprep.subr.mxu0 0.0
    %1026 = vmatpush1.msra.mxu0 0.0
    %1027 = vmatprep.subr.mxu0 0.0
    %1028 = vmatpush1.msra.mxu0 0.0
    %1029 = vmatprep.subr.mxu0 0.0
    %1030 = vmatpush1.msra.mxu0 0.0
    %1031 = vmatprep.subr.mxu0 0.0
    %1032 = vmatpush1.msra.mxu0 0.0
    %1033 = vmatprep.subr.mxu0 0.0
    %1034 = vmatpush1.msra.mxu0 0.0
    %1035 = vmatprep.subr.mxu0 0.0
    %1036 = vmatpush1.msra.mxu0 0.0
    %1037 = vmatprep.subr.mxu0 0.0
    %1038 = vmatpush1.msra.mxu0 0.0
    %1039 = vmatprep.subr.mxu0 0.0
    %1040 = vmatpush1.msra.mxu0 0.0
    %1041 = vmatprep.subr.mxu0 0.0
    %1042 = vmatpush1.msra.mxu0 0.0
    %1043 = vmatprep.subr.mxu0 0.0
    %1044 = vmatpush1.msra.mxu0 0.0
    %1045 = vmatprep.subr.mxu0 0.0
    %1046 = vmatpush1.msra.mxu0 0.0
    %1047 = vmatprep.subr.mxu0 0.0
    %1048 = vmatpush1.msra.mxu0 0.0
    %1049 = vmatprep.subr.mxu0 0.0
    %1050 = vmatpush1.msra.mxu0 0.0
    %1051 = vmatprep.subr.mxu0 0.0
    %1052 = vmatpush1.msra.mxu0 0.0
    %1053 = vmatprep.subr.mxu0 0.0
    %1054 = vmatpush1.msra.mxu0 0.0
    %1055 = vmatprep.subr.mxu0 0.0
    %1056 = vmatpush1.msra.mxu0 0.0
    %1057 = vmatprep.subr.mxu0 0.0
    %1058 = vmatpush1.msra.mxu0 0.0
    %1059 = vmatprep.subr.mxu0 0.0
    %1060 = vmatpush1.msra.mxu0 0.0
    %1061 = vmatprep.mubr.f32.mxu0 0.0
    %v1062 = vand.u32 %v802, 4294901760
    %v1063 = vsub.f32 %v802, %v1062
    %1064 = vmatmul.mubr.f32.gmra.mrb[0].mxu0 %v1063
    %v1065 = vpop.f32.mrb[0].mxu0
    %v1066 = vadd.f32 %v982, %v1065
    %v1067 = vpop.f32.mrb[0].mxu0
    %1068 = vmatprep.mubr.f32.mxu0 0.0
    %v1069 = vand.u32 %v805, 4294901760
    %v1070 = vsub.f32 %v805, %v1069
    %1071 = vmatmul.mubr.f32.gmra.mrb[0].mxu0 %v1070
    %v1072 = vpop.f32.mrb[0].mxu0
    %v1073 = vadd.f32 %v988, %v1072
    %v1074 = vpop.f32.mrb[0].mxu0
    %1075 = vdwg.mxu0
    %1076 = vmatprep.subr.mxu0 0.0
    %v1077 = vand.u32 %v798, 4294901760
    %1078 = vmatpush1.msra.mxu0 %v1077
    %1079 = vmatprep.subr.mxu0 0.0
    %v1080 = vand.u32 %v799, 4294901760
    %1081 = vmatpush1.msra.mxu0 %v1080
    %1082 = vmatprep.subr.mxu0 0.0
    %v1083 = vand.u32 %v809, 4294901760
    %1084 = vmatpush1.msra.mxu0 %v1083
    %1085 = vmatprep.subr.mxu0 0.0
    %1086 = vmatpush1.msra.mxu0 0.0
    %1087 = vmatprep.subr.mxu0 0.0
    %1088 = vmatpush1.msra.mxu0 0.0
    %1089 = vmatprep.subr.mxu0 0.0
    %1090 = vmatpush1.msra.mxu0 0.0
    %1091 = vmatprep.subr.mxu0 0.0
    %1092 = vmatpush1.msra.mxu0 0.0
    %1093 = vmatprep.subr.mxu0 0.0
    %1094 = vmatpush1.msra.mxu0 0.0
    %1095 = vmatprep.subr.mxu0 0.0
    %1096 = vmatpush1.msra.mxu0 0.0
    %1097 = vmatprep.subr.mxu0 0.0
    %1098 = vmatpush1.msra.mxu0 0.0
    %1099 = vmatprep.subr.mxu0 0.0
    %1100 = vmatpush1.msra.mxu0 0.0
    %1101 = vmatprep.subr.mxu0 0.0
    %1102 = vmatpush1.msra.mxu0 0.0
    %1103 = vmatprep.subr.mxu0 0.0
    %1104 = vmatpush1.msra.mxu0 0.0
    %1105 = vmatprep.subr.mxu0 0.0
    %1106 = vmatpush1.msra.mxu0 0.0
    %1107 = vmatprep.subr.mxu0 0.0
    %1108 = vmatpush1.msra.mxu0 0.0
    %1109 = vmatprep.subr.mxu0 0.0
    %1110 = vmatpush1.msra.mxu0 0.0
    %1111 = vmatprep.subr.mxu0 0.0
    %1112 = vmatpush1.msra.mxu0 0.0
    %1113 = vmatprep.subr.mxu0 0.0
    %1114 = vmatpush1.msra.mxu0 0.0
    %1115 = vmatprep.subr.mxu0 0.0
    %1116 = vmatpush1.msra.mxu0 0.0
    %1117 = vmatprep.subr.mxu0 0.0
    %1118 = vmatpush1.msra.mxu0 0.0
    %1119 = vmatprep.subr.mxu0 0.0
    %1120 = vmatpush1.msra.mxu0 0.0
    %1121 = vmatprep.subr.mxu0 0.0
    %1122 = vmatpush1.msra.mxu0 0.0
    %1123 = vmatprep.subr.mxu0 0.0
    %1124 = vmatpush1.msra.mxu0 0.0
    %1125 = vmatprep.subr.mxu0 0.0
    %1126 = vmatpush1.msra.mxu0 0.0
    %1127 = vmatprep.subr.mxu0 0.0
    %1128 = vmatpush1.msra.mxu0 0.0
    %1129 = vmatprep.subr.mxu0 0.0
    %1130 = vmatpush1.msra.mxu0 0.0
    %1131 = vmatprep.subr.mxu0 0.0
    %1132 = vmatpush1.msra.mxu0 0.0
    %1133 = vmatprep.subr.mxu0 0.0
    %1134 = vmatpush1.msra.mxu0 0.0
    %1135 = vmatprep.subr.mxu0 0.0
    %1136 = vmatpush1.msra.mxu0 0.0
    %1137 = vmatprep.subr.mxu0 0.0
    %1138 = vmatpush1.msra.mxu0 0.0
    %1139 = vmatprep.subr.mxu0 0.0
    %1140 = vmatpush1.msra.mxu0 0.0
    %1141 = vmatprep.subr.mxu0 0.0
    %1142 = vmatpush1.msra.mxu0 0.0
    %1143 = vmatprep.mubr.f32.mxu0 0.0
    %v1144 = vand.u32 %v802, 4294901760
    %v1145 = vsub.f32 %v802, %v1144
    %v1146 = vand.u32 %v1145, 4294901760
    %1147 = vmatmul.mubr.f32.gmra.mrb[0].mxu0 %v1146
    %v1148 = vpop.f32.mrb[0].mxu0
    %v1149 = vadd.f32 %v1066, %v1148
    %v1150 = vpop.f32.mrb[0].mxu0
    %1151 = vmatprep.mubr.f32.mxu0 0.0
    %v1152 = vand.u32 %v805, 4294901760
    %v1153 = vsub.f32 %v805, %v1152
    %v1154 = vand.u32 %v1153, 4294901760
    %1155 = vmatmul.mubr.f32.gmra.mrb[0].mxu0 %v1154
    %v1156 = vpop.f32.mrb[0].mxu0
    %v1157 = vadd.f32 %v1073, %v1156
    %v1158 = vpop.f32.mrb[0].mxu0
    %1159 = vdwg.mxu0
    %1160 = vmatprep.subr.mxu0 0.0
    %v1161 = vand.u32 %v798, 4294901760
    %v1162 = vsub.f32 %v798, %v1161
    %v1163 = vand.u32 %v1162, 4294901760
    %1164 = vmatpush1.msra.mxu0 %v1163
    %1165 = vmatprep.subr.mxu0 0.0
    %v1166 = vand.u32 %v799, 4294901760
    %v1167 = vsub.f32 %v799, %v1166
    %v1168 = vand.u32 %v1167, 4294901760
    %1169 = vmatpush1.msra.mxu0 %v1168
    %1170 = vmatprep.subr.mxu0 0.0
    %v1171 = vand.u32 %v809, 4294901760
    %v1172 = vsub.f32 %v809, %v1171
    %v1173 = vand.u32 %v1172, 4294901760
    %1174 = vmatpush1.msra.mxu0 %v1173
    %1175 = vmatprep.subr.mxu0 0.0
    %1176 = vmatpush1.msra.mxu0 0.0
    %1177 = vmatprep.subr.mxu0 0.0
    %1178 = vmatpush1.msra.mxu0 0.0
    %1179 = vmatprep.subr.mxu0 0.0
    %1180 = vmatpush1.msra.mxu0 0.0
    %1181 = vmatprep.subr.mxu0 0.0
    %1182 = vmatpush1.msra.mxu0 0.0
    %1183 = vmatprep.subr.mxu0 0.0
    %1184 = vmatpush1.msra.mxu0 0.0
    %1185 = vmatprep.subr.mxu0 0.0
    %1186 = vmatpush1.msra.mxu0 0.0
    %1187 = vmatprep.subr.mxu0 0.0
    %1188 = vmatpush1.msra.mxu0 0.0
    %1189 = vmatprep.subr.mxu0 0.0
    %1190 = vmatpush1.msra.mxu0 0.0
    %1191 = vmatprep.subr.mxu0 0.0
    %1192 = vmatpush1.msra.mxu0 0.0
    %1193 = vmatprep.subr.mxu0 0.0
    %1194 = vmatpush1.msra.mxu0 0.0
    %1195 = vmatprep.subr.mxu0 0.0
    %1196 = vmatpush1.msra.mxu0 0.0
    %1197 = vmatprep.subr.mxu0 0.0
    %1198 = vmatpush1.msra.mxu0 0.0
    %1199 = vmatprep.subr.mxu0 0.0
    %1200 = vmatpush1.msra.mxu0 0.0
    %1201 = vmatprep.subr.mxu0 0.0
    %1202 = vmatpush1.msra.mxu0 0.0
    %1203 = vmatprep.subr.mxu0 0.0
    %1204 = vmatpush1.msra.mxu0 0.0
    %1205 = vmatprep.subr.mxu0 0.0
    %1206 = vmatpush1.msra.mxu0 0.0
    %1207 = vmatprep.subr.mxu0 0.0
    %1208 = vmatpush1.msra.mxu0 0.0
    %1209 = vmatprep.subr.mxu0 0.0
    %1210 = vmatpush1.msra.mxu0 0.0
    %1211 = vmatprep.subr.mxu0 0.0
    %1212 = vmatpush1.msra.mxu0 0.0
    %1213 = vmatprep.subr.mxu0 0.0
    %1214 = vmatpush1.msra.mxu0 0.0
    %1215 = vmatprep.subr.mxu0 0.0
    %1216 = vmatpush1.msra.mxu0 0.0
    %1217 = vmatprep.subr.mxu0 0.0
    %1218 = vmatpush1.msra.mxu0 0.0
    %1219 = vmatprep.subr.mxu0 0.0
    %1220 = vmatpush1.msra.mxu0 0.0
    %1221 = vmatprep.subr.mxu0 0.0
    %1222 = vmatpush1.msra.mxu0 0.0
    %1223 = vmatprep.subr.mxu0 0.0
    %1224 = vmatpush1.msra.mxu0 0.0
    %1225 = vmatprep.subr.mxu0 0.0
    %1226 = vmatpush1.msra.mxu0 0.0
    %1227 = vmatprep.subr.mxu0 0.0
    %1228 = vmatpush1.msra.mxu0 0.0
    %1229 = vmatprep.subr.mxu0 0.0
    %1230 = vmatpush1.msra.mxu0 0.0
    %1231 = vmatprep.subr.mxu0 0.0
    %1232 = vmatpush1.msra.mxu0 0.0
    %1233 = vmatprep.mubr.f32.mxu0 0.0
    %v1234 = vand.u32 %v802, 4294901760
    %1235 = vmatmul.mubr.f32.gmra.mrb[0].mxu0 %v1234
    %v1236 = vpop.f32.mrb[0].mxu0
    %v1237 = vadd.f32 %v1149, %v1236
    %v1238 = vpop.f32.mrb[0].mxu0
    %1239 = vmatprep.mubr.f32.mxu0 0.0
    %v1240 = vand.u32 %v805, 4294901760
    %1241 = vmatmul.mubr.f32.gmra.mrb[0].mxu0 %v1240
    %v1242 = vpop.f32.mrb[0].mxu0
    %v1243 = vadd.f32 %v1157, %v1242
    %v1244 = vpop.f32.mrb[0].mxu0
    %1245 = vdwg.mxu0
    %1246 = vmatprep.subr.mxu0 0.0
    %v1247 = vand.u32 %v798, 4294901760
    %1248 = vmatpush1.msra.mxu0 %v1247
    %1249 = vmatprep.subr.mxu0 0.0
    %v1250 = vand.u32 %v799, 4294901760
    %1251 = vmatpush1.msra.mxu0 %v1250
    %1252 = vmatprep.subr.mxu0 0.0
    %v1253 = vand.u32 %v809, 4294901760
    %1254 = vmatpush1.msra.mxu0 %v1253
    %1255 = vmatprep.subr.mxu0 0.0
    %1256 = vmatpush1.msra.mxu0 0.0
    %1257 = vmatprep.subr.mxu0 0.0
    %1258 = vmatpush1.msra.mxu0 0.0
    %1259 = vmatprep.subr.mxu0 0.0
    %1260 = vmatpush1.msra.mxu0 0.0
    %1261 = vmatprep.subr.mxu0 0.0
    %1262 = vmatpush1.msra.mxu0 0.0
    %1263 = vmatprep.subr.mxu0 0.0
    %1264 = vmatpush1.msra.mxu0 0.0
    %1265 = vmatprep.subr.mxu0 0.0
    %1266 = vmatpush1.msra.mxu0 0.0
    %1267 = vmatprep.subr.mxu0 0.0
    %1268 = vmatpush1.msra.mxu0 0.0
    %1269 = vmatprep.subr.mxu0 0.0
    %1270 = vmatpush1.msra.mxu0 0.0
    %1271 = vmatprep.subr.mxu0 0.0
    %1272 = vmatpush1.msra.mxu0 0.0
    %1273 = vmatprep.subr.mxu0 0.0
    %1274 = vmatpush1.msra.mxu0 0.0
    %1275 = vmatprep.subr.mxu0 0.0
    %1276 = vmatpush1.msra.mxu0 0.0
    %1277 = vmatprep.subr.mxu0 0.0
    %1278 = vmatpush1.msra.mxu0 0.0
    %1279 = vmatprep.subr.mxu0 0.0
    %1280 = vmatpush1.msra.mxu0 0.0
    %1281 = vmatprep.subr.mxu0 0.0
    %1282 = vmatpush1.msra.mxu0 0.0
    %1283 = vmatprep.subr.mxu0 0.0
    %1284 = vmatpush1.msra.mxu0 0.0
    %1285 = vmatprep.subr.mxu0 0.0
    %1286 = vmatpush1.msra.mxu0 0.0
    %1287 = vmatprep.subr.mxu0 0.0
    %1288 = vmatpush1.msra.mxu0 0.0
    %1289 = vmatprep.subr.mxu0 0.0
    %1290 = vmatpush1.msra.mxu0 0.0
    %1291 = vmatprep.subr.mxu0 0.0
    %1292 = vmatpush1.msra.mxu0 0.0
    %1293 = vmatprep.subr.mxu0 0.0
    %1294 = vmatpush1.msra.mxu0 0.0
    %1295 = vmatprep.subr.mxu0 0.0
    %1296 = vmatpush1.msra.mxu0 0.0
    %1297 = vmatprep.subr.mxu0 0.0
    %1298 = vmatpush1.msra.mxu0 0.0
    %1299 = vmatprep.subr.mxu0 0.0
    %1300 = vmatpush1.msra.mxu0 0.0
    %1301 = vmatprep.subr.mxu0 0.0
    %1302 = vmatpush1.msra.mxu0 0.0
    %1303 = vmatprep.subr.mxu0 0.0
    %1304 = vmatpush1.msra.mxu0 0.0
    %1305 = vmatprep.subr.mxu0 0.0
    %1306 = vmatpush1.msra.mxu0 0.0
    %1307 = vmatprep.subr.mxu0 0.0
    %1308 = vmatpush1.msra.mxu0 0.0
    %1309 = vmatprep.subr.mxu0 0.0
    %1310 = vmatpush1.msra.mxu0 0.0
    %1311 = vmatprep.subr.mxu0 0.0
    %1312 = vmatpush1.msra.mxu0 0.0
    %1313 = vmatprep.mubr.f32.mxu0 0.0
    %v1314 = vand.u32 %v802, 4294901760
    %1315 = vmatmul.mubr.f32.gmra.mrb[0].mxu0 %v1314
    %v1316 = vpop.f32.mrb[0].mxu0
    %v1317 = vadd.f32 %v1237, %v1316
    %v1318 = vpop.f32.mrb[0].mxu0
    %1319 = vmatprep.mubr.f32.mxu0 0.0
    %v1320 = vand.u32 %v805, 4294901760
    %1321 = vmatmul.mubr.f32.gmra.mrb[0].mxu0 %v1320
    %v1322 = vpop.f32.mrb[0].mxu0
    %v1323 = vadd.f32 %v1243, %v1322
    %v1324 = vpop.f32.mrb[0].mxu0
    %1325 = vdwg.mxu0
    %vm1326 = vcmask 523264
    %v1328 = vsel %vm1326, %v786, 0
    %v1331 = vsel %vm1326, %v787, 0
    %1333 = vmatprep.subr.mxu0 0.0
    %v1334 = vand.u32 %v788, 4294901760
    %1335 = vmatpush1.msra.mxu0 %v1334
    %1336 = vmatprep.subr.mxu0 0.0
    %v1337 = vand.u32 %v789, 4294901760
    %1338 = vmatpush1.msra.mxu0 %v1337
    %1339 = vmatprep.subr.mxu0 0.0
    %v1340 = vand.u32 %v790, 4294901760
    %1341 = vmatpush1.msra.mxu0 %v1340
    %1342 = vmatprep.subr.mxu0 0.0
    %v1343 = vand.u32 %v791, 4294901760
    %1344 = vmatpush1.msra.mxu0 %v1343
    %1345 = vmatprep.subr.mxu0 0.0
    %v1346 = vand.u32 %v792, 4294901760
    %1347 = vmatpush1.msra.mxu0 %v1346
    %1348 = vmatprep.subr.mxu0 0.0
    %v1349 = vand.u32 %v793, 4294901760
    %1350 = vmatpush1.msra.mxu0 %v1349
    %1351 = vmatprep.subr.mxu0 0.0
    %v1352 = vand.u32 %v794, 4294901760
    %1353 = vmatpush1.msra.mxu0 %v1352
    %1354 = vmatprep.subr.mxu0 0.0
    %v1355 = vand.u32 %v795, 4294901760
    %1356 = vmatpush1.msra.mxu0 %v1355
    %1357 = vmatprep.subr.mxu0 0.0
    %1358 = vmatpush1.msra.mxu0 0.0
    %1359 = vmatprep.subr.mxu0 0.0
    %1360 = vmatpush1.msra.mxu0 0.0
    %1361 = vmatprep.subr.mxu0 0.0
    %1362 = vmatpush1.msra.mxu0 0.0
    %1363 = vmatprep.subr.mxu0 0.0
    %1364 = vmatpush1.msra.mxu0 0.0
    %1365 = vmatprep.subr.mxu0 0.0
    %1366 = vmatpush1.msra.mxu0 0.0
    %1367 = vmatprep.subr.mxu0 0.0
    %1368 = vmatpush1.msra.mxu0 0.0
    %1369 = vmatprep.subr.mxu0 0.0
    %1370 = vmatpush1.msra.mxu0 0.0
    %1371 = vmatprep.subr.mxu0 0.0
    %1372 = vmatpush1.msra.mxu0 0.0
    %1373 = vmatprep.subr.mxu0 0.0
    %1374 = vmatpush1.msra.mxu0 0.0
    %1375 = vmatprep.subr.mxu0 0.0
    %1376 = vmatpush1.msra.mxu0 0.0
    %1377 = vmatprep.subr.mxu0 0.0
    %1378 = vmatpush1.msra.mxu0 0.0
    %1379 = vmatprep.subr.mxu0 0.0
    %1380 = vmatpush1.msra.mxu0 0.0
    %1381 = vmatprep.subr.mxu0 0.0
    %1382 = vmatpush1.msra.mxu0 0.0
    %1383 = vmatprep.subr.mxu0 0.0
    %1384 = vmatpush1.msra.mxu0 0.0
    %1385 = vmatprep.subr.mxu0 0.0
    %1386 = vmatpush1.msra.mxu0 0.0
    %1387 = vmatprep.subr.mxu0 0.0
    %1388 = vmatpush1.msra.mxu0 0.0
    %1389 = vmatprep.subr.mxu0 0.0
    %1390 = vmatpush1.msra.mxu0 0.0
    %1391 = vmatprep.subr.mxu0 0.0
    %1392 = vmatpush1.msra.mxu0 0.0
    %1393 = vmatprep.subr.mxu0 0.0
    %1394 = vmatpush1.msra.mxu0 0.0
    %1395 = vmatprep.subr.mxu0 0.0
    %1396 = vmatpush1.msra.mxu0 0.0
    %1397 = vmatprep.subr.mxu0 0.0
    %1398 = vmatpush1.msra.mxu0 0.0
    %1399 = vmatprep.subr.mxu0 0.0
    %1400 = vmatpush1.msra.mxu0 0.0
    %1401 = vmatprep.subr.mxu0 0.0
    %1402 = vmatpush1.msra.mxu0 0.0
    %1403 = vmatprep.subr.mxu0 0.0
    %1404 = vmatpush1.msra.mxu0 0.0
    %1405 = vmatprep.mubr.f32.mxu0 0.0
    %v1406 = vand.u32 %v1328, 4294901760
    %v1407 = vsub.f32 %v1328, %v1406
    %v1408 = vand.u32 %v1407, 4294901760
    %v1409 = vsub.f32 %v1407, %v1408
    %v1410 = vand.u32 %v1409, 4294901760
    %1411 = vmatmul.mubr.f32.gmra.mrb[0].mxu0 %v1410
    %v1412 = vpop.f32.mrb[0].mxu0
    %v1413 = vadd.f32 %v1317, %v1412
    %v1414 = vpop.f32.mrb[0].mxu0
    %1415 = vmatprep.mubr.f32.mxu0 0.0
    %v1416 = vand.u32 %v1331, 4294901760
    %v1417 = vsub.f32 %v1331, %v1416
    %v1418 = vand.u32 %v1417, 4294901760
    %v1419 = vsub.f32 %v1417, %v1418
    %v1420 = vand.u32 %v1419, 4294901760
    %1421 = vmatmul.mubr.f32.gmra.mrb[0].mxu0 %v1420
    %v1422 = vpop.f32.mrb[0].mxu0
    %v1423 = vadd.f32 %v1323, %v1422
    %v1424 = vpop.f32.mrb[0].mxu0
    %1425 = vdwg.mxu0
    %1426 = vmatprep.subr.mxu0 0.0
    %v1427 = vand.u32 %v788, 4294901760
    %v1428 = vsub.f32 %v788, %v1427
    %v1429 = vand.u32 %v1428, 4294901760
    %v1430 = vsub.f32 %v1428, %v1429
    %v1431 = vand.u32 %v1430, 4294901760
    %1432 = vmatpush1.msra.mxu0 %v1431
    %1433 = vmatprep.subr.mxu0 0.0
    %v1434 = vand.u32 %v789, 4294901760
    %v1435 = vsub.f32 %v789, %v1434
    %v1436 = vand.u32 %v1435, 4294901760
    %v1437 = vsub.f32 %v1435, %v1436
    %v1438 = vand.u32 %v1437, 4294901760
    %1439 = vmatpush1.msra.mxu0 %v1438
    %1440 = vmatprep.subr.mxu0 0.0
    %v1441 = vand.u32 %v790, 4294901760
    %v1442 = vsub.f32 %v790, %v1441
    %v1443 = vand.u32 %v1442, 4294901760
    %v1444 = vsub.f32 %v1442, %v1443
    %v1445 = vand.u32 %v1444, 4294901760
    %1446 = vmatpush1.msra.mxu0 %v1445
    %1447 = vmatprep.subr.mxu0 0.0
    %v1448 = vand.u32 %v791, 4294901760
    %v1449 = vsub.f32 %v791, %v1448
    %v1450 = vand.u32 %v1449, 4294901760
    %v1451 = vsub.f32 %v1449, %v1450
    %v1452 = vand.u32 %v1451, 4294901760
    %1453 = vmatpush1.msra.mxu0 %v1452
    %1454 = vmatprep.subr.mxu0 0.0
    %v1455 = vand.u32 %v792, 4294901760
    %v1456 = vsub.f32 %v792, %v1455
    %v1457 = vand.u32 %v1456, 4294901760
    %v1458 = vsub.f32 %v1456, %v1457
    %v1459 = vand.u32 %v1458, 4294901760
    %1460 = vmatpush1.msra.mxu0 %v1459
    %1461 = vmatprep.subr.mxu0 0.0
    %v1462 = vand.u32 %v793, 4294901760
    %v1463 = vsub.f32 %v793, %v1462
    %v1464 = vand.u32 %v1463, 4294901760
    %v1465 = vsub.f32 %v1463, %v1464
    %v1466 = vand.u32 %v1465, 4294901760
    %1467 = vmatpush1.msra.mxu0 %v1466
    %1468 = vmatprep.subr.mxu0 0.0
    %v1469 = vand.u32 %v794, 4294901760
    %v1470 = vsub.f32 %v794, %v1469
    %v1471 = vand.u32 %v1470, 4294901760
    %v1472 = vsub.f32 %v1470, %v1471
    %v1473 = vand.u32 %v1472, 4294901760
    %1474 = vmatpush1.msra.mxu0 %v1473
    %1475 = vmatprep.subr.mxu0 0.0
    %v1476 = vand.u32 %v795, 4294901760
    %v1477 = vsub.f32 %v795, %v1476
    %v1478 = vand.u32 %v1477, 4294901760
    %v1479 = vsub.f32 %v1477, %v1478
    %v1480 = vand.u32 %v1479, 4294901760
    %1481 = vmatpush1.msra.mxu0 %v1480
    %1482 = vmatprep.subr.mxu0 0.0
    %1483 = vmatpush1.msra.mxu0 0.0
    %1484 = vmatprep.subr.mxu0 0.0
    %1485 = vmatpush1.msra.mxu0 0.0
    %1486 = vmatprep.subr.mxu0 0.0
    %1487 = vmatpush1.msra.mxu0 0.0
    %1488 = vmatprep.subr.mxu0 0.0
    %1489 = vmatpush1.msra.mxu0 0.0
    %1490 = vmatprep.subr.mxu0 0.0
    %1491 = vmatpush1.msra.mxu0 0.0
    %1492 = vmatprep.subr.mxu0 0.0
    %1493 = vmatpush1.msra.mxu0 0.0
    %1494 = vmatprep.subr.mxu0 0.0
    %1495 = vmatpush1.msra.mxu0 0.0
    %1496 = vmatprep.subr.mxu0 0.0
    %1497 = vmatpush1.msra.mxu0 0.0
    %1498 = vmatprep.subr.mxu0 0.0
    %1499 = vmatpush1.msra.mxu0 0.0
    %1500 = vmatprep.subr.mxu0 0.0
    %1501 = vmatpush1.msra.mxu0 0.0
    %1502 = vmatprep.subr.mxu0 0.0
    %1503 = vmatpush1.msra.mxu0 0.0
    %1504 = vmatprep.subr.mxu0 0.0
    %1505 = vmatpush1.msra.mxu0 0.0
    %1506 = vmatprep.subr.mxu0 0.0
    %1507 = vmatpush1.msra.mxu0 0.0
    %1508 = vmatprep.subr.mxu0 0.0
    %1509 = vmatpush1.msra.mxu0 0.0
    %1510 = vmatprep.subr.mxu0 0.0
    %1511 = vmatpush1.msra.mxu0 0.0
    %1512 = vmatprep.subr.mxu0 0.0
    %1513 = vmatpush1.msra.mxu0 0.0
    %1514 = vmatprep.subr.mxu0 0.0
    %1515 = vmatpush1.msra.mxu0 0.0
    %1516 = vmatprep.subr.mxu0 0.0
    %1517 = vmatpush1.msra.mxu0 0.0
    %1518 = vmatprep.subr.mxu0 0.0
    %1519 = vmatpush1.msra.mxu0 0.0
    %1520 = vmatprep.subr.mxu0 0.0
    %1521 = vmatpush1.msra.mxu0 0.0
    %1522 = vmatprep.subr.mxu0 0.0
    %1523 = vmatpush1.msra.mxu0 0.0
    %1524 = vmatprep.subr.mxu0 0.0
    %1525 = vmatpush1.msra.mxu0 0.0
    %1526 = vmatprep.subr.mxu0 0.0
    %1527 = vmatpush1.msra.mxu0 0.0
    %1528 = vmatprep.subr.mxu0 0.0
    %1529 = vmatpush1.msra.mxu0 0.0
    %1530 = vmatprep.mubr.f32.mxu0 0.0
    %v1531 = vand.u32 %v1328, 4294901760
    %1532 = vmatmul.mubr.f32.gmra.mrb[0].mxu0 %v1531
    %v1533 = vpop.f32.mrb[0].mxu0
    %v1534 = vadd.f32 %v1413, %v1533
    %v1535 = vpop.f32.mrb[0].mxu0
    %1536 = vmatprep.mubr.f32.mxu0 0.0
    %v1537 = vand.u32 %v1331, 4294901760
    %1538 = vmatmul.mubr.f32.gmra.mrb[0].mxu0 %v1537
    %v1539 = vpop.f32.mrb[0].mxu0
    %v1540 = vadd.f32 %v1423, %v1539
    %v1541 = vpop.f32.mrb[0].mxu0
    %1542 = vdwg.mxu0
    %1543 = vmatprep.subr.mxu0 0.0
    %v1544 = vand.u32 %v788, 4294901760
    %v1545 = vsub.f32 %v788, %v1544
    %1546 = vmatpush1.msra.mxu0 %v1545
    %1547 = vmatprep.subr.mxu0 0.0
    %v1548 = vand.u32 %v789, 4294901760
    %v1549 = vsub.f32 %v789, %v1548
    %1550 = vmatpush1.msra.mxu0 %v1549
    %1551 = vmatprep.subr.mxu0 0.0
    %v1552 = vand.u32 %v790, 4294901760
    %v1553 = vsub.f32 %v790, %v1552
    %1554 = vmatpush1.msra.mxu0 %v1553
    %1555 = vmatprep.subr.mxu0 0.0
    %v1556 = vand.u32 %v791, 4294901760
    %v1557 = vsub.f32 %v791, %v1556
    %1558 = vmatpush1.msra.mxu0 %v1557
    %1559 = vmatprep.subr.mxu0 0.0
    %v1560 = vand.u32 %v792, 4294901760
    %v1561 = vsub.f32 %v792, %v1560
    %1562 = vmatpush1.msra.mxu0 %v1561
    %1563 = vmatprep.subr.mxu0 0.0
    %v1564 = vand.u32 %v793, 4294901760
    %v1565 = vsub.f32 %v793, %v1564
    %1566 = vmatpush1.msra.mxu0 %v1565
    %1567 = vmatprep.subr.mxu0 0.0
    %v1568 = vand.u32 %v794, 4294901760
    %v1569 = vsub.f32 %v794, %v1568
    %1570 = vmatpush1.msra.mxu0 %v1569
    %1571 = vmatprep.subr.mxu0 0.0
    %v1572 = vand.u32 %v795, 4294901760
    %v1573 = vsub.f32 %v795, %v1572
    %1574 = vmatpush1.msra.mxu0 %v1573
    %1575 = vmatprep.subr.mxu0 0.0
    %1576 = vmatpush1.msra.mxu0 0.0
    %1577 = vmatprep.subr.mxu0 0.0
    %1578 = vmatpush1.msra.mxu0 0.0
    %1579 = vmatprep.subr.mxu0 0.0
    %1580 = vmatpush1.msra.mxu0 0.0
    %1581 = vmatprep.subr.mxu0 0.0
    %1582 = vmatpush1.msra.mxu0 0.0
    %1583 = vmatprep.subr.mxu0 0.0
    %1584 = vmatpush1.msra.mxu0 0.0
    %1585 = vmatprep.subr.mxu0 0.0
    %1586 = vmatpush1.msra.mxu0 0.0
    %1587 = vmatprep.subr.mxu0 0.0
    %1588 = vmatpush1.msra.mxu0 0.0
    %1589 = vmatprep.subr.mxu0 0.0
    %1590 = vmatpush1.msra.mxu0 0.0
    %1591 = vmatprep.subr.mxu0 0.0
    %1592 = vmatpush1.msra.mxu0 0.0
    %1593 = vmatprep.subr.mxu0 0.0
    %1594 = vmatpush1.msra.mxu0 0.0
    %1595 = vmatprep.subr.mxu0 0.0
    %1596 = vmatpush1.msra.mxu0 0.0
    %1597 = vmatprep.subr.mxu0 0.0
    %1598 = vmatpush1.msra.mxu0 0.0
    %1599 = vmatprep.subr.mxu0 0.0
    %1600 = vmatpush1.msra.mxu0 0.0
    %1601 = vmatprep.subr.mxu0 0.0
    %1602 = vmatpush1.msra.mxu0 0.0
    %1603 = vmatprep.subr.mxu0 0.0
    %1604 = vmatpush1.msra.mxu0 0.0
    %1605 = vmatprep.subr.mxu0 0.0
    %1606 = vmatpush1.msra.mxu0 0.0
    %1607 = vmatprep.subr.mxu0 0.0
    %1608 = vmatpush1.msra.mxu0 0.0
    %1609 = vmatprep.subr.mxu0 0.0
    %1610 = vmatpush1.msra.mxu0 0.0
    %1611 = vmatprep.subr.mxu0 0.0
    %1612 = vmatpush1.msra.mxu0 0.0
    %1613 = vmatprep.subr.mxu0 0.0
    %1614 = vmatpush1.msra.mxu0 0.0
    %1615 = vmatprep.subr.mxu0 0.0
    %1616 = vmatpush1.msra.mxu0 0.0
    %1617 = vmatprep.subr.mxu0 0.0
    %1618 = vmatpush1.msra.mxu0 0.0
    %1619 = vmatprep.subr.mxu0 0.0
    %1620 = vmatpush1.msra.mxu0 0.0
    %1621 = vmatprep.subr.mxu0 0.0
    %1622 = vmatpush1.msra.mxu0 0.0
    %1623 = vmatprep.mubr.f32.mxu0 0.0
    %v1624 = vand.u32 %v1328, 4294901760
    %v1625 = vsub.f32 %v1328, %v1624
    %1626 = vmatmul.mubr.f32.gmra.mrb[0].mxu0 %v1625
    %v1627 = vpop.f32.mrb[0].mxu0
    %v1628 = vadd.f32 %v1534, %v1627
    %v1629 = vpop.f32.mrb[0].mxu0
    %1630 = vmatprep.mubr.f32.mxu0 0.0
    %v1631 = vand.u32 %v1331, 4294901760
    %v1632 = vsub.f32 %v1331, %v1631
    %1633 = vmatmul.mubr.f32.gmra.mrb[0].mxu0 %v1632
    %v1634 = vpop.f32.mrb[0].mxu0
    %v1635 = vadd.f32 %v1540, %v1634
    %v1636 = vpop.f32.mrb[0].mxu0
    %1637 = vdwg.mxu0
    %1638 = vmatprep.subr.mxu0 0.0
    %v1639 = vand.u32 %v788, 4294901760
    %1640 = vmatpush1.msra.mxu0 %v1639
    %1641 = vmatprep.subr.mxu0 0.0
    %v1642 = vand.u32 %v789, 4294901760
    %1643 = vmatpush1.msra.mxu0 %v1642
    %1644 = vmatprep.subr.mxu0 0.0
    %v1645 = vand.u32 %v790, 4294901760
    %1646 = vmatpush1.msra.mxu0 %v1645
    %1647 = vmatprep.subr.mxu0 0.0
    %v1648 = vand.u32 %v791, 4294901760
    %1649 = vmatpush1.msra.mxu0 %v1648
    %1650 = vmatprep.subr.mxu0 0.0
    %v1651 = vand.u32 %v792, 4294901760
    %1652 = vmatpush1.msra.mxu0 %v1651
    %1653 = vmatprep.subr.mxu0 0.0
    %v1654 = vand.u32 %v793, 4294901760
    %1655 = vmatpush1.msra.mxu0 %v1654
    %1656 = vmatprep.subr.mxu0 0.0
    %v1657 = vand.u32 %v794, 4294901760
    %1658 = vmatpush1.msra.mxu0 %v1657
    %1659 = vmatprep.subr.mxu0 0.0
    %v1660 = vand.u32 %v795, 4294901760
    %1661 = vmatpush1.msra.mxu0 %v1660
    %1662 = vmatprep.subr.mxu0 0.0
    %1663 = vmatpush1.msra.mxu0 0.0
    %1664 = vmatprep.subr.mxu0 0.0
    %1665 = vmatpush1.msra.mxu0 0.0
    %1666 = vmatprep.subr.mxu0 0.0
    %1667 = vmatpush1.msra.mxu0 0.0
    %1668 = vmatprep.subr.mxu0 0.0
    %1669 = vmatpush1.msra.mxu0 0.0
    %1670 = vmatprep.subr.mxu0 0.0
    %1671 = vmatpush1.msra.mxu0 0.0
    %1672 = vmatprep.subr.mxu0 0.0
    %1673 = vmatpush1.msra.mxu0 0.0
    %1674 = vmatprep.subr.mxu0 0.0
    %1675 = vmatpush1.msra.mxu0 0.0
    %1676 = vmatprep.subr.mxu0 0.0
    %1677 = vmatpush1.msra.mxu0 0.0
    %1678 = vmatprep.subr.mxu0 0.0
    %1679 = vmatpush1.msra.mxu0 0.0
    %1680 = vmatprep.subr.mxu0 0.0
    %1681 = vmatpush1.msra.mxu0 0.0
    %1682 = vmatprep.subr.mxu0 0.0
    %1683 = vmatpush1.msra.mxu0 0.0
    %1684 = vmatprep.subr.mxu0 0.0
    %1685 = vmatpush1.msra.mxu0 0.0
    %1686 = vmatprep.subr.mxu0 0.0
    %1687 = vmatpush1.msra.mxu0 0.0
    %1688 = vmatprep.subr.mxu0 0.0
    %1689 = vmatpush1.msra.mxu0 0.0
    %1690 = vmatprep.subr.mxu0 0.0
    %1691 = vmatpush1.msra.mxu0 0.0
    %1692 = vmatprep.subr.mxu0 0.0
    %1693 = vmatpush1.msra.mxu0 0.0
    %1694 = vmatprep.subr.mxu0 0.0
    %1695 = vmatpush1.msra.mxu0 0.0
    %1696 = vmatprep.subr.mxu0 0.0
    %1697 = vmatpush1.msra.mxu0 0.0
    %1698 = vmatprep.subr.mxu0 0.0
    %1699 = vmatpush1.msra.mxu0 0.0
    %1700 = vmatprep.subr.mxu0 0.0
    %1701 = vmatpush1.msra.mxu0 0.0
    %1702 = vmatprep.subr.mxu0 0.0
    %1703 = vmatpush1.msra.mxu0 0.0
    %1704 = vmatprep.subr.mxu0 0.0
    %1705 = vmatpush1.msra.mxu0 0.0
    %1706 = vmatprep.subr.mxu0 0.0
    %1707 = vmatpush1.msra.mxu0 0.0
    %1708 = vmatprep.subr.mxu0 0.0
    %1709 = vmatpush1.msra.mxu0 0.0
    %1710 = vmatprep.mubr.f32.mxu0 0.0
    %v1711 = vand.u32 %v1328, 4294901760
    %v1712 = vsub.f32 %v1328, %v1711
    %v1713 = vand.u32 %v1712, 4294901760
    %1714 = vmatmul.mubr.f32.gmra.mrb[0].mxu0 %v1713
    %v1715 = vpop.f32.mrb[0].mxu0
    %v1716 = vadd.f32 %v1628, %v1715
    %v1717 = vpop.f32.mrb[0].mxu0
    %1718 = vmatprep.mubr.f32.mxu0 0.0
    %v1719 = vand.u32 %v1331, 4294901760
    %v1720 = vsub.f32 %v1331, %v1719
    %v1721 = vand.u32 %v1720, 4294901760
    %1722 = vmatmul.mubr.f32.gmra.mrb[0].mxu0 %v1721
    %v1723 = vpop.f32.mrb[0].mxu0
    %v1724 = vadd.f32 %v1635, %v1723
    %v1725 = vpop.f32.mrb[0].mxu0
    %1726 = vdwg.mxu0
    %1727 = vmatprep.subr.mxu0 0.0
    %v1728 = vand.u32 %v788, 4294901760
    %v1729 = vsub.f32 %v788, %v1728
    %v1730 = vand.u32 %v1729, 4294901760
    %1731 = vmatpush1.msra.mxu0 %v1730
    %1732 = vmatprep.subr.mxu0 0.0
    %v1733 = vand.u32 %v789, 4294901760
    %v1734 = vsub.f32 %v789, %v1733
    %v1735 = vand.u32 %v1734, 4294901760
    %1736 = vmatpush1.msra.mxu0 %v1735
    %1737 = vmatprep.subr.mxu0 0.0
    %v1738 = vand.u32 %v790, 4294901760
    %v1739 = vsub.f32 %v790, %v1738
    %v1740 = vand.u32 %v1739, 4294901760
    %1741 = vmatpush1.msra.mxu0 %v1740
    %1742 = vmatprep.subr.mxu0 0.0
    %v1743 = vand.u32 %v791, 4294901760
    %v1744 = vsub.f32 %v791, %v1743
    %v1745 = vand.u32 %v1744, 4294901760
    %1746 = vmatpush1.msra.mxu0 %v1745
    %1747 = vmatprep.subr.mxu0 0.0
    %v1748 = vand.u32 %v792, 4294901760
    %v1749 = vsub.f32 %v792, %v1748
    %v1750 = vand.u32 %v1749, 4294901760
    %1751 = vmatpush1.msra.mxu0 %v1750
    %1752 = vmatprep.subr.mxu0 0.0
    %v1753 = vand.u32 %v793, 4294901760
    %v1754 = vsub.f32 %v793, %v1753
    %v1755 = vand.u32 %v1754, 4294901760
    %1756 = vmatpush1.msra.mxu0 %v1755
    %1757 = vmatprep.subr.mxu0 0.0
    %v1758 = vand.u32 %v794, 4294901760
    %v1759 = vsub.f32 %v794, %v1758
    %v1760 = vand.u32 %v1759, 4294901760
    %1761 = vmatpush1.msra.mxu0 %v1760
    %1762 = vmatprep.subr.mxu0 0.0
    %v1763 = vand.u32 %v795, 4294901760
    %v1764 = vsub.f32 %v795, %v1763
    %v1765 = vand.u32 %v1764, 4294901760
    %1766 = vmatpush1.msra.mxu0 %v1765
    %1767 = vmatprep.subr.mxu0 0.0
    %1768 = vmatpush1.msra.mxu0 0.0
    %1769 = vmatprep.subr.mxu0 0.0
    %1770 = vmatpush1.msra.mxu0 0.0
    %1771 = vmatprep.subr.mxu0 0.0
    %1772 = vmatpush1.msra.mxu0 0.0
    %1773 = vmatprep.subr.mxu0 0.0
    %1774 = vmatpush1.msra.mxu0 0.0
    %1775 = vmatprep.subr.mxu0 0.0
    %1776 = vmatpush1.msra.mxu0 0.0
    %1777 = vmatprep.subr.mxu0 0.0
    %1778 = vmatpush1.msra.mxu0 0.0
    %1779 = vmatprep.subr.mxu0 0.0
    %1780 = vmatpush1.msra.mxu0 0.0
    %1781 = vmatprep.subr.mxu0 0.0
    %1782 = vmatpush1.msra.mxu0 0.0
    %1783 = vmatprep.subr.mxu0 0.0
    %1784 = vmatpush1.msra.mxu0 0.0
    %1785 = vmatprep.subr.mxu0 0.0
    %1786 = vmatpush1.msra.mxu0 0.0
    %1787 = vmatprep.subr.mxu0 0.0
    %1788 = vmatpush1.msra.mxu0 0.0
    %1789 = vmatprep.subr.mxu0 0.0
    %1790 = vmatpush1.msra.mxu0 0.0
    %1791 = vmatprep.subr.mxu0 0.0
    %1792 = vmatpush1.msra.mxu0 0.0
    %1793 = vmatprep.subr.mxu0 0.0
    %1794 = vmatpush1.msra.mxu0 0.0
    %1795 = vmatprep.subr.mxu0 0.0
    %1796 = vmatpush1.msra.mxu0 0.0
    %1797 = vmatprep.subr.mxu0 0.0
    %1798 = vmatpush1.msra.mxu0 0.0
    %1799 = vmatprep.subr.mxu0 0.0
    %1800 = vmatpush1.msra.mxu0 0.0
    %1801 = vmatprep.subr.mxu0 0.0
    %1802 = vmatpush1.msra.mxu0 0.0
    %1803 = vmatprep.subr.mxu0 0.0
    %1804 = vmatpush1.msra.mxu0 0.0
    %1805 = vmatprep.subr.mxu0 0.0
    %1806 = vmatpush1.msra.mxu0 0.0
    %1807 = vmatprep.subr.mxu0 0.0
    %1808 = vmatpush1.msra.mxu0 0.0
    %1809 = vmatprep.subr.mxu0 0.0
    %1810 = vmatpush1.msra.mxu0 0.0
    %1811 = vmatprep.subr.mxu0 0.0
    %1812 = vmatpush1.msra.mxu0 0.0
    %1813 = vmatprep.subr.mxu0 0.0
    %1814 = vmatpush1.msra.mxu0 0.0
    %1815 = vmatprep.mubr.f32.mxu0 0.0
    %v1816 = vand.u32 %v1328, 4294901760
    %1817 = vmatmul.mubr.f32.gmra.mrb[0].mxu0 %v1816
    %v1818 = vpop.f32.mrb[0].mxu0
    %v1819 = vadd.f32 %v1716, %v1818
    %v1820 = vpop.f32.mrb[0].mxu0
    %1821 = vmatprep.mubr.f32.mxu0 0.0
    %v1822 = vand.u32 %v1331, 4294901760
    %1823 = vmatmul.mubr.f32.gmra.mrb[0].mxu0 %v1822
    %v1824 = vpop.f32.mrb[0].mxu0
    %v1825 = vadd.f32 %v1724, %v1824
    %v1826 = vpop.f32.mrb[0].mxu0
    %1827 = vdwg.mxu0
    %1828 = vmatprep.subr.mxu0 0.0
    %v1829 = vand.u32 %v788, 4294901760
    %1830 = vmatpush1.msra.mxu0 %v1829
    %1831 = vmatprep.subr.mxu0 0.0
    %v1832 = vand.u32 %v789, 4294901760
    %1833 = vmatpush1.msra.mxu0 %v1832
    %1834 = vmatprep.subr.mxu0 0.0
    %v1835 = vand.u32 %v790, 4294901760
    %1836 = vmatpush1.msra.mxu0 %v1835
    %1837 = vmatprep.subr.mxu0 0.0
    %v1838 = vand.u32 %v791, 4294901760
    %1839 = vmatpush1.msra.mxu0 %v1838
    %1840 = vmatprep.subr.mxu0 0.0
    %v1841 = vand.u32 %v792, 4294901760
    %1842 = vmatpush1.msra.mxu0 %v1841
    %1843 = vmatprep.subr.mxu0 0.0
    %v1844 = vand.u32 %v793, 4294901760
    %1845 = vmatpush1.msra.mxu0 %v1844
    %1846 = vmatprep.subr.mxu0 0.0
    %v1847 = vand.u32 %v794, 4294901760
    %1848 = vmatpush1.msra.mxu0 %v1847
    %1849 = vmatprep.subr.mxu0 0.0
    %v1850 = vand.u32 %v795, 4294901760
    %1851 = vmatpush1.msra.mxu0 %v1850
    %1852 = vmatprep.subr.mxu0 0.0
    %1853 = vmatpush1.msra.mxu0 0.0
    %1854 = vmatprep.subr.mxu0 0.0
    %1855 = vmatpush1.msra.mxu0 0.0
    %1856 = vmatprep.subr.mxu0 0.0
    %1857 = vmatpush1.msra.mxu0 0.0
    %1858 = vmatprep.subr.mxu0 0.0
    %1859 = vmatpush1.msra.mxu0 0.0
    %1860 = vmatprep.subr.mxu0 0.0
    %1861 = vmatpush1.msra.mxu0 0.0
    %1862 = vmatprep.subr.mxu0 0.0
    %1863 = vmatpush1.msra.mxu0 0.0
    %1864 = vmatprep.subr.mxu0 0.0
    %1865 = vmatpush1.msra.mxu0 0.0
    %1866 = vmatprep.subr.mxu0 0.0
    %1867 = vmatpush1.msra.mxu0 0.0
    %1868 = vmatprep.subr.mxu0 0.0
    %1869 = vmatpush1.msra.mxu0 0.0
    %1870 = vmatprep.subr.mxu0 0.0
    %1871 = vmatpush1.msra.mxu0 0.0
    %1872 = vmatprep.subr.mxu0 0.0
    %1873 = vmatpush1.msra.mxu0 0.0
    %1874 = vmatprep.subr.mxu0 0.0
    %1875 = vmatpush1.msra.mxu0 0.0
    %1876 = vmatprep.subr.mxu0 0.0
    %1877 = vmatpush1.msra.mxu0 0.0
    %1878 = vmatprep.subr.mxu0 0.0
    %1879 = vmatpush1.msra.mxu0 0.0
    %1880 = vmatprep.subr.mxu0 0.0
    %1881 = vmatpush1.msra.mxu0 0.0
    %1882 = vmatprep.subr.mxu0 0.0
    %1883 = vmatpush1.msra.mxu0 0.0
    %1884 = vmatprep.subr.mxu0 0.0
    %1885 = vmatpush1.msra.mxu0 0.0
    %1886 = vmatprep.subr.mxu0 0.0
    %1887 = vmatpush1.msra.mxu0 0.0
    %1888 = vmatprep.subr.mxu0 0.0
    %1889 = vmatpush1.msra.mxu0 0.0
    %1890 = vmatprep.subr.mxu0 0.0
    %1891 = vmatpush1.msra.mxu0 0.0
    %1892 = vmatprep.subr.mxu0 0.0
    %1893 = vmatpush1.msra.mxu0 0.0
    %1894 = vmatprep.subr.mxu0 0.0
    %1895 = vmatpush1.msra.mxu0 0.0
    %1896 = vmatprep.subr.mxu0 0.0
    %1897 = vmatpush1.msra.mxu0 0.0
    %1898 = vmatprep.subr.mxu0 0.0
    %1899 = vmatpush1.msra.mxu0 0.0
    %1900 = vmatprep.mubr.f32.mxu0 0.0
    %v1901 = vand.u32 %v1328, 4294901760
    %1902 = vmatmul.mubr.f32.gmra.mrb[0].mxu0 %v1901
    %v1903 = vpop.f32.mrb[0].mxu0
    %v1904 = vadd.f32 %v1819, %v1903
    %v1905 = vpop.f32.mrb[0].mxu0
    %1906 = vmatprep.mubr.f32.mxu0 0.0
    %v1907 = vand.u32 %v1331, 4294901760
    %1908 = vmatmul.mubr.f32.gmra.mrb[0].mxu0 %v1907
    %v1909 = vpop.f32.mrb[0].mxu0
    %v1910 = vadd.f32 %v1825, %v1909
    %v1911 = vpop.f32.mrb[0].mxu0
    %1912 = vdwg.mxu0
    %v1913 = vld [vmem:[%s10] sm:$0x1]
    %v1915 = vlaneseq
    %v1916 = vshrl.u32 %v1915, 7
    %v1917 = vsub.s32 0, %v1916
    %v1918 = vrot.slane %v1913, %v1917
    %v1920 = vadd.f32 %v1904, %v1918
    %v1921 = vadd.f32 %v1910, %v1918
    %v1922 = vld [vmem:[%s11] sm:$0x1]
    %v1923 = vld [vmem:[%s12] sm:$0x1]
    %v1924 = vsel %vm1326, %v1920, 0.0
    %1925 = vadd.xlane.f32.xlu0 %v1924
    %v1926 = vpop.xlane.xlu0 %1925
    %v1927 = vsel %vm1326, %v1921, 0.0
    %1928 = vadd.xlane.f32.xlu0 %v1927
    %v1929 = vpop.xlane.xlu0 %1928
    %v1930 = vrcp.pop 64.0
    %v1931 = vmul.f32 %v1926, %v1930
    %v1932 = vmul.f32 %v1929, %v1930
    %v1933 = vsub.f32 %v1920, %v1931
    %v1934 = vsub.f32 %v1921, %v1932
    %v1935 = vmul.f32 %v1933, %v1933
    %v1936 = vmul.f32 %v1934, %v1934
    %v1937 = vsel %vm1326, %v1935, 0.0
    %1938 = vadd.xlane.f32.xlu0 %v1937
    %v1939 = vpop.xlane.xlu0 %1938
    %v1940 = vsel %vm1326, %v1936, 0.0
    %1941 = vadd.xlane.f32.xlu0 %v1940
    %v1942 = vpop.xlane.xlu0 %1941
    %v1943 = vmul.f32 %v1939, %v1930
    %v1944 = vmul.f32 %v1942, %v1930
    %v1945 = vadd.f32 %v1943, 1e-05
    %v1946 = vadd.f32 %v1944, 1e-05
    %v1947 = vrsqrt.pop %v1945
    %v1948 = vrsqrt.pop %v1946
    %v1949 = vmul.f32 %v1933, %v1947
    %v1950 = vmul.f32 %v1934, %v1948
    %v1952 = vlaneseq
    %v1953 = vshrl.u32 %v1952, 7
    %v1954 = vsub.s32 0, %v1953
    %v1955 = vrot.slane %v1922, %v1954
    %v1957 = vmul.f32 %v1949, %v1955
    %v1958 = vmul.f32 %v1950, %v1955
    %v1960 = vlaneseq
    %v1961 = vshrl.u32 %v1960, 7
    %v1962 = vsub.s32 0, %v1961
    %v1963 = vrot.slane %v1923, %v1962
    %v1965 = vadd.f32 %v1957, %v1963
    %v1966 = vadd.f32 %v1958, %v1963
    %1967 = vst.msk [vmem:[#allocation2] sm:$0xff] %vm1326, %v1965
    %1968 = vst.msk [vmem:[#allocation2 + $0x8] sm:$0xff] %vm1326, %v1966
    // Predicated region
    $region54: #{tpu_custom_call.1} parent=1 // pred_check
      _
    $region55: #{tpu_custom_call.1} parent=1 // pred_check_branch
      %1970 = sbr.rel (0) target = $region57
    $region56: #{tpu_custom_call.1} parent=1 // pred_region
      %s1972 = ssub.s32 256, 256
      %1973 = vsyncadd [#allocation3], %s1972
      %s1974 = sshll.u32 [#allocation2], 4
      %s1975 = int_to_ptr.vmem [resolvable:$true] %s1974
      %1980 = dma.vmem_to_hbm [thread:$0]  %s1975, 256, %s13, [#allocation3], 128, 128, 8
    $region57: #{tpu_custom_call.1} parent=1 // pred_fallthru
      _
    // Predicated region
    $region58: #{tpu_custom_call.1} parent=1 // pred_check
      _
    $region59: #{tpu_custom_call.1} parent=1 // pred_check_branch
      %1982 = sbr.rel (0) target = $region61
    $region60: #{tpu_custom_call.1} parent=1 // pred_region
      %1983 = dma.done [#allocation3], 256
    $region61: #{tpu_custom_call.1} parent=1 // pred_fallthru
      _
    %1984 = vsyncpa [#allocation3], 1

</llo_original>
